<compile_context>
chip_gen: v7x
topology: tpu7x:2x2x1
jax: 0.10.0
libtpu: 0.0.40
codegen_flags: <defaults>
</compile_context>

<pallas_src>
import functools

import jax
import jax.numpy as jnp
from jax import lax
from jax.experimental import pallas as pl
from jax.experimental.pallas import tpu as pltpu


def _round_up(n, m):
    return ((n + m - 1) // m) * m


# ---------------------------------------------------------------------------
# Fused, interleaved 2-layer LSTM encoder kernel (one time chunk per grid step).
# ---------------------------------------------------------------------------
def _encoder_kernel(x_ref, wih1_ref, whh1_ref, b1_ref,
                    wih2_ref, whh2_ref, b2_ref,
                    out_ref,
                    h1_st, c1_st, h2_st, c2_st,
                    *, hid1, hid2, steps, unroll):
    # x_ref:    (TC, B, F)   unpadded, time-major input chunk
    # wih*_ref: (Fin, 4*H)   input->gate weights, gates packed (i, f, o, g)
    # whh*_ref: (H,   4*H)   hidden->gate weights, gates packed (i, f, o, g)
    # b*_ref:   (1,   4*H)   b_ih + b_hh
    # out_ref:  (TC, B, H2)  layer-2 hidden states for this chunk
    # h*_st/c*_st: (B, H)    recurrent state carried across time chunks (VMEM scratch)
    B = x_ref.shape[1]
    mdt = wih1_ref.dtype

    # Zero initial state at the first time chunk only.
    @pl.when(pl.program_id(0) == 0)
    def _():
        h1_st[...] = jnp.zeros_like(h1_st)
        c1_st[...] = jnp.zeros_like(c1_st)
        h2_st[...] = jnp.zeros_like(h2_st)
        c2_st[...] = jnp.zeros_like(c2_st)

    # Hoist bias broadcasts out of the loop (JAX does not CSE broadcast_in_dim).
    b1 = jnp.broadcast_to(b1_ref[...], (B, 4 * hid1))
    b2 = jnp.broadcast_to(b2_ref[...], (B, 4 * hid2))

    def lstm_cell(gates, c, hid):
        # Gates packed (i, f, o, g): one sigmoid over the contiguous 3*H sigmoid block,
        # one tanh over the last H lanes (EUP), then cheap 64/32-lane slices.
        s = jax.nn.sigmoid(gates[:, :3 * hid])
        g = jnp.tanh(gates[:, 3 * hid:])
        i_t = s[:, :hid]
        f_t = s[:, hid:2 * hid]
        o_t = s[:, 2 * hid:3 * hid]
        c_new = f_t * c + i_t * g
        h_new = o_t * jnp.tanh(c_new)
        return h_new, c_new

    def step(t, carry):
        h1, c1, h2, c2 = carry
        # Layer 1.  x_t @ W_ih1 has no loop-carried dependence; within the unrolled
        # window the scheduler issues it early, so only h1 @ W_hh1 is on the chain.
        x_t = x_ref[t].astype(mdt)
        g1 = (jnp.dot(x_t, wih1_ref[...], preferred_element_type=jnp.float32)
              + jnp.dot(h1.astype(mdt), whh1_ref[...], preferred_element_type=jnp.float32)
              + b1)
        h1, c1 = lstm_cell(g1, c1, hid1)
        # Layer 2, fed directly from this step's h1 (never materialized in HBM/VMEM).
        g2 = (jnp.dot(h1.astype(mdt), wih2_ref[...], preferred_element_type=jnp.float32)
              + jnp.dot(h2.astype(mdt), whh2_ref[...], preferred_element_type=jnp.float32)
              + b2)
        h2, c2 = lstm_cell(g2, c2, hid2)
        out_ref[t] = h2.astype(out_ref.dtype)
        return (h1, c1, h2, c2)

    carry = (h1_st[...], c1_st[...], h2_st[...], c2_st[...])
    # Capped unroll: enough cross-step MXU/EUP overlap without exploding vreg pressure.
    carry = lax.fori_loop(0, steps, step, carry, unroll=max(1, min(unroll, steps)))
    h1, c1, h2, c2 = carry
    h1_st[...] = h1
    c1_st[...] = c1
    h2_st[...] = h2
    c2_st[...] = c2


# ---------------------------------------------------------------------------
# Parameter preparation: transpose to (in, 4*H), reorder gates from PyTorch's
# (i, f, g, o) to (i, f, o, g) so the sigmoid gates are lane-contiguous, and
# pack gates with NO per-gate padding.
# ---------------------------------------------------------------------------
_GATE_ORDER = (0, 1, 3, 2)   # PyTorch (i, f, g, o) -> (i, f, o, g)


def _prep_lstm_params(w_ih, w_hh, b_ih, b_hh, mxu_dtype):
    H4, F = w_ih.shape
    H = H4 // 4
    wih = jnp.concatenate([w_ih.reshape(4, H, F)[g] for g in _GATE_ORDER], axis=0).T  # (F, 4H)
    whh = jnp.concatenate([w_hh.reshape(4, H, H)[g] for g in _GATE_ORDER], axis=0).T  # (H, 4H)
    b = (b_ih + b_hh).reshape(4, H)
    b = jnp.concatenate([b[g] for g in _GATE_ORDER], axis=0).reshape(1, 4 * H)
    return wih.astype(mxu_dtype), whh.astype(mxu_dtype), b.astype(jnp.float32)


# ---------------------------------------------------------------------------
# Encoder forward: rnn1 (hidden = 2*embedding_dim) -> rnn2 (embedding_dim)
# ---------------------------------------------------------------------------
def encoder_forward(x, params, *, mxu_dtype=jnp.float32, time_chunk=128, unroll=8):
    """x: (B, T, n_features), batch_first like the PyTorch module.

    mxu_dtype: dtype fed to the MXU (weights + matmul inputs); accumulation and all
    pointwise math stay f32.  jnp.bfloat16 is recommended on v6e/v7x (looser numerics).
    """
    B, T, F = x.shape
    H1 = params["w_hh1"].shape[1]      # hidden_dim = 2 * embedding_dim
    H2 = params["w_hh2"].shape[1]      # embedding_dim

    wih1, whh1, b1 = _prep_lstm_params(params["w_ih1"], params["w_hh1"],
                                       params["b_ih1"], params["b_hh1"], mxu_dtype)
    wih2, whh2, b2 = _prep_lstm_params(params["w_ih2"], params["w_hh2"],
                                       params["b_ih2"], params["b_hh2"], mxu_dtype)

    # Time-major, unpadded x (no batch/feature inflation in HBM).  Only the time axis is
    # rounded up to a chunk multiple; the padded steps come after every real step, so
    # they cannot affect the outputs that are kept.
    tc = max(1, min(time_chunk, T))
    Tp = _round_up(T, tc)
    x_tm = jnp.transpose(x.astype(jnp.float32), (1, 0, 2))
    if Tp != T:
        x_tm = jnp.pad(x_tm, ((0, Tp - T), (0, 0), (0, 0)))
    num_chunks = Tp // tc

    kernel = functools.partial(_encoder_kernel, hid1=H1, hid2=H2, steps=tc, unroll=unroll)

    def resident(a):
        # Full-extent block + constant index_map: DMA'd once, stays VMEM-resident.
        return pl.BlockSpec(a.shape, lambda c, _nd=a.ndim: (0,) * _nd)

    out_tm = pl.pallas_call(
        kernel,
        out_shape=jax.ShapeDtypeStruct((Tp, B, H2), jnp.float32),
        grid=(num_chunks,),
        in_specs=[
            pl.BlockSpec((tc, B, F), lambda c: (c, 0, 0)),     # x: chunked on time
            resident(wih1), resident(whh1), resident(b1),
            resident(wih2), resident(whh2), resident(b2),
        ],
        out_specs=pl.BlockSpec((tc, B, H2), lambda c: (c, 0, 0)),
        scratch_shapes=[
            pltpu.VMEM((B, H1), jnp.float32),   # h1 (carried across chunks)
            pltpu.VMEM((B, H1), jnp.float32),   # c1
            pltpu.VMEM((B, H2), jnp.float32),   # h2
            pltpu.VMEM((B, H2), jnp.float32),   # c2
        ],
        compiler_params=pltpu.CompilerParams(
            dimension_semantics=("arbitrary",)),   # time chunks are sequential
    )(x_tm, wih1, whh1, b1, wih2, whh2, b2)

    # back to batch-first, strip time padding.
    return jnp.transpose(out_tm[:T], (1, 0, 2))


# ---------------------------------------------------------------------------
# Deterministic parameter init (PyTorch-style uniform(-1/sqrt(H), 1/sqrt(H)))
# ---------------------------------------------------------------------------
def init_encoder_params(key, n_features, embedding_dim):
    hidden_dim = 2 * embedding_dim
    ks = jax.random.split(key, 8)

    def u(k, shape, h):
        s = 1.0 / jnp.sqrt(h)
        return jax.random.uniform(k, shape, jnp.float32, -s, s)

    return {
        # rnn1: n_features -> hidden_dim
        "w_ih1": u(ks[0], (4 * hidden_dim, n_features), hidden_dim),
        "w_hh1": u(ks[1], (4 * hidden_dim, hidden_dim), hidden_dim),
        "b_ih1": u(ks[2], (4 * hidden_dim,), hidden_dim),
        "b_hh1": u(ks[3], (4 * hidden_dim,), hidden_dim),
        # rnn2: hidden_dim -> embedding_dim
        "w_ih2": u(ks[4], (4 * embedding_dim, hidden_dim), embedding_dim),
        "w_hh2": u(ks[5], (4 * embedding_dim, embedding_dim), embedding_dim),
        "b_ih2": u(ks[6], (4 * embedding_dim,), embedding_dim),
        "b_hh2": u(ks[7], (4 * embedding_dim,), embedding_dim),
    }


# ---------------------------------------------------------------------------
# Pure-JAX reference (same math, lax.scan) for the correctness cross-check.
# ---------------------------------------------------------------------------
def _ref_lstm_layer(x_tm, w_ih, w_hh, b_ih, b_hh):
    H = w_ih.shape[0] // 4
    b = b_ih + b_hh

    def step(carry, x_t):
        h, c = carry
        gates = x_t @ w_ih.T + h @ w_hh.T + b
        i = jax.nn.sigmoid(gates[:, 0 * H:1 * H])
        f = jax.nn.sigmoid(gates[:, 1 * H:2 * H])
        g = jnp.tanh(gates[:, 2 * H:3 * H])
        o = jax.nn.sigmoid(gates[:, 3 * H:4 * H])
        c = f * c + i * g
        h = o * jnp.tanh(c)
        return (h, c), h

    B = x_tm.shape[1]
    init = (jnp.zeros((B, H), jnp.float32), jnp.zeros((B, H), jnp.float32))
    _, hs = lax.scan(step, init, x_tm)
    return hs


def _ref_encoder(x, p):
    x_tm = jnp.transpose(x, (1, 0, 2))
    h1 = _ref_lstm_layer(x_tm, p["w_ih1"], p["w_hh1"], p["b_ih1"], p["b_hh1"])
    h2 = _ref_lstm_layer(h1, p["w_ih2"], p["w_hh2"], p["b_ih2"], p["b_hh2"])
    return jnp.transpose(h2, (1, 0, 2))


if __name__ == "__main__":
    B, T, n_features, embedding_dim = 2, 8, 4, 32

    key = jax.random.PRNGKey(0)
    k_param, k_x = jax.random.split(key)
    params = init_encoder_params(k_param, n_features, embedding_dim)
    x = jax.random.normal(k_x, (B, T, n_features), jnp.float32)

    ref = jax.block_until_ready(_ref_encoder(x, params))

    # f32 MXU path; time_chunk=4 exercises the multi-chunk grid + cross-chunk state carry.
    out = jax.block_until_ready(encoder_forward(x, params, time_chunk=4))
    assert out.shape == (B, T, embedding_dim), out.shape
    max_err = float(jnp.abs(out - ref).max())
    assert jnp.allclose(out, ref, atol=5e-4, rtol=5e-4), f"f32 max abs err = {max_err}"

    # bf16 MXU path (recommended on v6e/v7x); f32 accumulation, looser tolerance.
    out_bf16 = jax.block_until_ready(
        encoder_forward(x, params, mxu_dtype=jnp.bfloat16))
    max_err_bf16 = float(jnp.abs(out_bf16 - ref).max())
    assert max_err_bf16 < 5e-2, f"bf16 max abs err = {max_err_bf16}"

    print("KERNEL_OK")
</pallas_src>

<mosaic_0001>
module attributes {stable_mosaic.version = 11 : i64} {
  func.func @_encoder_kernel(%arg0: i32, %arg1: memref<4x2x4xf32, #tpu.memory_space<vmem>>, %arg2: memref<4x256xf32, #tpu.memory_space<vmem>>, %arg3: memref<64x256xf32, #tpu.memory_space<vmem>>, %arg4: memref<1x256xf32, #tpu.memory_space<vmem>>, %arg5: memref<64x128xf32, #tpu.memory_space<vmem>>, %arg6: memref<32x128xf32, #tpu.memory_space<vmem>>, %arg7: memref<1x128xf32, #tpu.memory_space<vmem>>, %arg8: memref<4x2x32xf32, #tpu.memory_space<vmem>>, %arg9: memref<2x64xf32, #tpu.memory_space<vmem>>, %arg10: memref<2x64xf32, #tpu.memory_space<vmem>>, %arg11: memref<2x32xf32, #tpu.memory_space<vmem>>, %arg12: memref<2x32xf32, #tpu.memory_space<vmem>>) attributes {dimension_semantics = [#tpu.dimension_semantics<arbitrary>], iteration_bounds = array<i64: 2>, scalar_prefetch = 0 : i64, scratch_operands = 4 : i64, tpu.core_type = #tpu.core_type<tc>, window_params = [{transform_indices = @transform_0, window_bounds = array<i64: 4, 2, 4>}, {pipeline_mode = #tpu.pipeline_mode<synchronous>, transform_indices = @transform_1, window_bounds = array<i64: 4, 256>}, {pipeline_mode = #tpu.pipeline_mode<synchronous>, transform_indices = @transform_2, window_bounds = array<i64: 64, 256>}, {pipeline_mode = #tpu.pipeline_mode<synchronous>, transform_indices = @transform_3, window_bounds = array<i64: 1, 256>}, {pipeline_mode = #tpu.pipeline_mode<synchronous>, transform_indices = @transform_4, window_bounds = array<i64: 64, 128>}, {pipeline_mode = #tpu.pipeline_mode<synchronous>, transform_indices = @transform_5, window_bounds = array<i64: 32, 128>}, {pipeline_mode = #tpu.pipeline_mode<synchronous>, transform_indices = @transform_6, window_bounds = array<i64: 1, 128>}, {transform_indices = @transform_7, window_bounds = array<i64: 4, 2, 32>}]} {
    %c0_i32 = arith.constant 0 : i32
    %0 = arith.cmpi eq, %arg0, %c0_i32 : i32
    %1 = arith.extui %0 : i1 to i32
    %c0_i32_0 = arith.constant 0 : i32
    %2 = arith.cmpi ne, %1, %c0_i32_0 : i32
    scf.if %2 {
      %cst_92 = arith.constant 0.000000e+00 : f32
      %221 = vector.broadcast %cst_92 : f32 to vector<2x64xf32>
      %c0_93 = arith.constant 0 : index
      %c0_94 = arith.constant 0 : index
      %222 = vector.load %arg9[%c0_93, %c0_94] : memref<2x64xf32, #tpu.memory_space<vmem>>, vector<2x64xf32>
      tpu.vector_store %arg9[%c0_93, %c0_94], %221 {strides = array<i32>} : memref<2x64xf32, #tpu.memory_space<vmem>>, vector<2x64xf32>,
      %cst_95 = arith.constant 0.000000e+00 : f32
      %223 = vector.broadcast %cst_95 : f32 to vector<2x64xf32>
      %c0_96 = arith.constant 0 : index
      %c0_97 = arith.constant 0 : index
      %224 = vector.load %arg10[%c0_96, %c0_97] : memref<2x64xf32, #tpu.memory_space<vmem>>, vector<2x64xf32>
      tpu.vector_store %arg10[%c0_96, %c0_97], %223 {strides = array<i32>} : memref<2x64xf32, #tpu.memory_space<vmem>>, vector<2x64xf32>,
      %cst_98 = arith.constant 0.000000e+00 : f32
      %225 = vector.broadcast %cst_98 : f32 to vector<2x32xf32>
      %c0_99 = arith.constant 0 : index
      %c0_100 = arith.constant 0 : index
      %226 = vector.load %arg11[%c0_99, %c0_100] : memref<2x32xf32, #tpu.memory_space<vmem>>, vector<2x32xf32>
      tpu.vector_store %arg11[%c0_99, %c0_100], %225 {strides = array<i32>} : memref<2x32xf32, #tpu.memory_space<vmem>>, vector<2x32xf32>,
      %cst_101 = arith.constant 0.000000e+00 : f32
      %227 = vector.broadcast %cst_101 : f32 to vector<2x32xf32>
      %c0_102 = arith.constant 0 : index
      %c0_103 = arith.constant 0 : index
      %228 = vector.load %arg12[%c0_102, %c0_103] : memref<2x32xf32, #tpu.memory_space<vmem>>, vector<2x32xf32>
      tpu.vector_store %arg12[%c0_102, %c0_103], %227 {strides = array<i32>} : memref<2x32xf32, #tpu.memory_space<vmem>>, vector<2x32xf32>,
    } else {
    }
    %c0 = arith.constant 0 : index
    %c0_1 = arith.constant 0 : index
    %3 = vector.load %arg4[%c0, %c0_1] : memref<1x256xf32, #tpu.memory_space<vmem>>, vector<1x256xf32>
    %4 = vector.shape_cast %3 : vector<1x256xf32> to vector<1x256xf32>
    %5 = vector.broadcast %4 : vector<1x256xf32> to vector<2x256xf32>
    %c0_2 = arith.constant 0 : index
    %c0_3 = arith.constant 0 : index
    %6 = vector.load %arg7[%c0_2, %c0_3] : memref<1x128xf32, #tpu.memory_space<vmem>>, vector<1x128xf32>
    %7 = vector.shape_cast %6 : vector<1x128xf32> to vector<1x128xf32>
    %8 = vector.broadcast %7 : vector<1x128xf32> to vector<2x128xf32>
    %c0_4 = arith.constant 0 : index
    %c0_5 = arith.constant 0 : index
    %9 = vector.load %arg9[%c0_4, %c0_5] : memref<2x64xf32, #tpu.memory_space<vmem>>, vector<2x64xf32>
    %c0_6 = arith.constant 0 : index
    %c0_7 = arith.constant 0 : index
    %10 = vector.load %arg10[%c0_6, %c0_7] : memref<2x64xf32, #tpu.memory_space<vmem>>, vector<2x64xf32>
    %c0_8 = arith.constant 0 : index
    %c0_9 = arith.constant 0 : index
    %11 = vector.load %arg11[%c0_8, %c0_9] : memref<2x32xf32, #tpu.memory_space<vmem>>, vector<2x32xf32>
    %c0_10 = arith.constant 0 : index
    %c0_11 = arith.constant 0 : index
    %12 = vector.load %arg12[%c0_10, %c0_11] : memref<2x32xf32, #tpu.memory_space<vmem>>, vector<2x32xf32>
    %c0_i32_12 = arith.constant 0 : i32
    %13 = arith.index_cast %c0_i32_12 : i32 to index
    %c0_13 = arith.constant 0 : index
    %c0_14 = arith.constant 0 : index
    %14 = vector.load %arg1[%13, %c0_13, %c0_14] : memref<4x2x4xf32, #tpu.memory_space<vmem>>, vector<1x2x4xf32>
    %15 = vector.shape_cast %14 : vector<1x2x4xf32> to vector<2x4xf32>
    %c0_15 = arith.constant 0 : index
    %c0_16 = arith.constant 0 : index
    %16 = vector.load %arg2[%c0_15, %c0_16] : memref<4x256xf32, #tpu.memory_space<vmem>>, vector<4x256xf32>
    %cst = arith.constant dense<0.000000e+00> : vector<2x256xf32>
    %17 = tpu.matmul %15, %16, %cst {dimension_numbers = #tpu.dot_dimension_numbers<[1], [0], [0], [1], [0, 0, 1, 1], [], []>} : vector<2x4xf32>, vector<4x256xf32>, vector<2x256xf32> -> vector<2x256xf32>
    %c0_17 = arith.constant 0 : index
    %c0_18 = arith.constant 0 : index
    %18 = vector.load %arg3[%c0_17, %c0_18] : memref<64x256xf32, #tpu.memory_space<vmem>>, vector<64x256xf32>
    %cst_19 = arith.constant dense<0.000000e+00> : vector<2x256xf32>
    %19 = tpu.matmul %9, %18, %cst_19 {dimension_numbers = #tpu.dot_dimension_numbers<[1], [0], [0], [1], [0, 0, 1, 1], [], []>} : vector<2x64xf32>, vector<64x256xf32>, vector<2x256xf32> -> vector<2x256xf32>
    %20 = arith.addf %17, %19 : vector<2x256xf32>
    %21 = arith.addf %20, %5 : vector<2x256xf32>
    %22 = vector.extract_strided_slice %21 {offsets = [0, 0], sizes = [2, 192], strides = [1, 1]} : vector<2x256xf32> to vector<2x192xf32>
    %23 = arith.negf %22 : vector<2x192xf32>
    %24 = math.exp %23 : vector<2x192xf32>
    %cst_20 = arith.constant 1.000000e+00 : f32
    %25 = vector.broadcast %cst_20 : f32 to vector<2x192xf32>
    %26 = arith.addf %25, %24 : vector<2x192xf32>
    %27 = arith.divf %25, %26 : vector<2x192xf32>
    %28 = vector.extract_strided_slice %21 {offsets = [0, 192], sizes = [2, 64], strides = [1, 1]} : vector<2x256xf32> to vector<2x64xf32>
    %29 = math.tanh %28 : vector<2x64xf32>
    %30 = vector.extract_strided_slice %27 {offsets = [0, 0], sizes = [2, 64], strides = [1, 1]} : vector<2x192xf32> to vector<2x64xf32>
    %31 = vector.extract_strided_slice %27 {offsets = [0, 64], sizes = [2, 64], strides = [1, 1]} : vector<2x192xf32> to vector<2x64xf32>
    %32 = vector.extract_strided_slice %27 {offsets = [0, 128], sizes = [2, 64], strides = [1, 1]} : vector<2x192xf32> to vector<2x64xf32>
    %33 = arith.mulf %31, %10 : vector<2x64xf32>
    %34 = arith.mulf %30, %29 : vector<2x64xf32>
    %35 = arith.addf %33, %34 : vector<2x64xf32>
    %36 = math.tanh %35 : vector<2x64xf32>
    %37 = arith.mulf %32, %36 : vector<2x64xf32>
    %c0_21 = arith.constant 0 : index
    %c0_22 = arith.constant 0 : index
    %38 = vector.load %arg5[%c0_21, %c0_22] : memref<64x128xf32, #tpu.memory_space<vmem>>, vector<64x128xf32>
    %cst_23 = arith.constant dense<0.000000e+00> : vector<2x128xf32>
    %39 = tpu.matmul %37, %38, %cst_23 {dimension_numbers = #tpu.dot_dimension_numbers<[1], [0], [0], [1], [0, 0, 1, 1], [], []>} : vector<2x64xf32>, vector<64x128xf32>, vector<2x128xf32> -> vector<2x128xf32>
    %c0_24 = arith.constant 0 : index
    %c0_25 = arith.constant 0 : index
    %40 = vector.load %arg6[%c0_24, %c0_25] : memref<32x128xf32, #tpu.memory_space<vmem>>, vector<32x128xf32>
    %cst_26 = arith.constant dense<0.000000e+00> : vector<2x128xf32>
    %41 = tpu.matmul %11, %40, %cst_26 {dimension_numbers = #tpu.dot_dimension_numbers<[1], [0], [0], [1], [0, 0, 1, 1], [], []>} : vector<2x32xf32>, vector<32x128xf32>, vector<2x128xf32> -> vector<2x128xf32>
    %42 = arith.addf %39, %41 : vector<2x128xf32>
    %43 = arith.addf %42, %8 : vector<2x128xf32>
    %44 = vector.extract_strided_slice %43 {offsets = [0, 0], sizes = [2, 96], strides = [1, 1]} : vector<2x128xf32> to vector<2x96xf32>
    %45 = arith.negf %44 : vector<2x96xf32>
    %46 = math.exp %45 : vector<2x96xf32>
    %cst_27 = arith.constant 1.000000e+00 : f32
    %47 = vector.broadcast %cst_27 : f32 to vector<2x96xf32>
    %48 = arith.addf %47, %46 : vector<2x96xf32>
    %49 = arith.divf %47, %48 : vector<2x96xf32>
    %50 = vector.extract_strided_slice %43 {offsets = [0, 96], sizes = [2, 32], strides = [1, 1]} : vector<2x128xf32> to vector<2x32xf32>
    %51 = math.tanh %50 : vector<2x32xf32>
    %52 = vector.extract_strided_slice %49 {offsets = [0, 0], sizes = [2, 32], strides = [1, 1]} : vector<2x96xf32> to vector<2x32xf32>
    %53 = vector.extract_strided_slice %49 {offsets = [0, 32], sizes = [2, 32], strides = [1, 1]} : vector<2x96xf32> to vector<2x32xf32>
    %54 = vector.extract_strided_slice %49 {offsets = [0, 64], sizes = [2, 32], strides = [1, 1]} : vector<2x96xf32> to vector<2x32xf32>
    %55 = arith.mulf %53, %12 : vector<2x32xf32>
    %56 = arith.mulf %52, %51 : vector<2x32xf32>
    %57 = arith.addf %55, %56 : vector<2x32xf32>
    %58 = math.tanh %57 : vector<2x32xf32>
    %59 = arith.mulf %54, %58 : vector<2x32xf32>
    %60 = arith.index_cast %c0_i32_12 : i32 to index
    %c0_28 = arith.constant 0 : index
    %c0_29 = arith.constant 0 : index
    %61 = vector.load %arg8[%60, %c0_28, %c0_29] : memref<4x2x32xf32, #tpu.memory_space<vmem>>, vector<1x2x32xf32>
    %62 = vector.shape_cast %61 : vector<1x2x32xf32> to vector<2x32xf32>
    %63 = vector.shape_cast %59 : vector<2x32xf32> to vector<1x2x32xf32>
    tpu.vector_store %arg8[%60, %c0_28, %c0_29], %63 {strides = array<i32>} : memref<4x2x32xf32, #tpu.memory_space<vmem>>, vector<1x2x32xf32>,
    %c1_i32 = arith.constant 1 : i32
    %64 = arith.index_cast %c1_i32 : i32 to index
    %c0_30 = arith.constant 0 : index
    %c0_31 = arith.constant 0 : index
    %65 = vector.load %arg1[%64, %c0_30, %c0_31] : memref<4x2x4xf32, #tpu.memory_space<vmem>>, vector<1x2x4xf32>
    %66 = vector.shape_cast %65 : vector<1x2x4xf32> to vector<2x4xf32>
    %c0_32 = arith.constant 0 : index
    %c0_33 = arith.constant 0 : index
    %67 = vector.load %arg2[%c0_32, %c0_33] : memref<4x256xf32, #tpu.memory_space<vmem>>, vector<4x256xf32>
    %cst_34 = arith.constant dense<0.000000e+00> : vector<2x256xf32>
    %68 = tpu.matmul %66, %67, %cst_34 {dimension_numbers = #tpu.dot_dimension_numbers<[1], [0], [0], [1], [0, 0, 1, 1], [], []>} : vector<2x4xf32>, vector<4x256xf32>, vector<2x256xf32> -> vector<2x256xf32>
    %c0_35 = arith.constant 0 : index
    %c0_36 = arith.constant 0 : index
    %69 = vector.load %arg3[%c0_35, %c0_36] : memref<64x256xf32, #tpu.memory_space<vmem>>, vector<64x256xf32>
    %cst_37 = arith.constant dense<0.000000e+00> : vector<2x256xf32>
    %70 = tpu.matmul %37, %69, %cst_37 {dimension_numbers = #tpu.dot_dimension_numbers<[1], [0], [0], [1], [0, 0, 1, 1], [], []>} : vector<2x64xf32>, vector<64x256xf32>, vector<2x256xf32> -> vector<2x256xf32>
    %71 = arith.addf %68, %70 : vector<2x256xf32>
    %72 = arith.addf %71, %5 : vector<2x256xf32>
    %73 = vector.extract_strided_slice %72 {offsets = [0, 0], sizes = [2, 192], strides = [1, 1]} : vector<2x256xf32> to vector<2x192xf32>
    %74 = arith.negf %73 : vector<2x192xf32>
    %75 = math.exp %74 : vector<2x192xf32>
    %cst_38 = arith.constant 1.000000e+00 : f32
    %76 = vector.broadcast %cst_38 : f32 to vector<2x192xf32>
    %77 = arith.addf %76, %75 : vector<2x192xf32>
    %78 = arith.divf %76, %77 : vector<2x192xf32>
    %79 = vector.extract_strided_slice %72 {offsets = [0, 192], sizes = [2, 64], strides = [1, 1]} : vector<2x256xf32> to vector<2x64xf32>
    %80 = math.tanh %79 : vector<2x64xf32>
    %81 = vector.extract_strided_slice %78 {offsets = [0, 0], sizes = [2, 64], strides = [1, 1]} : vector<2x192xf32> to vector<2x64xf32>
    %82 = vector.extract_strided_slice %78 {offsets = [0, 64], sizes = [2, 64], strides = [1, 1]} : vector<2x192xf32> to vector<2x64xf32>
    %83 = vector.extract_strided_slice %78 {offsets = [0, 128], sizes = [2, 64], strides = [1, 1]} : vector<2x192xf32> to vector<2x64xf32>
    %84 = arith.mulf %82, %35 : vector<2x64xf32>
    %85 = arith.mulf %81, %80 : vector<2x64xf32>
    %86 = arith.addf %84, %85 : vector<2x64xf32>
    %87 = math.tanh %86 : vector<2x64xf32>
    %88 = arith.mulf %83, %87 : vector<2x64xf32>
    %c0_39 = arith.constant 0 : index
    %c0_40 = arith.constant 0 : index
    %89 = vector.load %arg5[%c0_39, %c0_40] : memref<64x128xf32, #tpu.memory_space<vmem>>, vector<64x128xf32>
    %cst_41 = arith.constant dense<0.000000e+00> : vector<2x128xf32>
    %90 = tpu.matmul %88, %89, %cst_41 {dimension_numbers = #tpu.dot_dimension_numbers<[1], [0], [0], [1], [0, 0, 1, 1], [], []>} : vector<2x64xf32>, vector<64x128xf32>, vector<2x128xf32> -> vector<2x128xf32>
    %c0_42 = arith.constant 0 : index
    %c0_43 = arith.constant 0 : index
    %91 = vector.load %arg6[%c0_42, %c0_43] : memref<32x128xf32, #tpu.memory_space<vmem>>, vector<32x128xf32>
    %cst_44 = arith.constant dense<0.000000e+00> : vector<2x128xf32>
    %92 = tpu.matmul %59, %91, %cst_44 {dimension_numbers = #tpu.dot_dimension_numbers<[1], [0], [0], [1], [0, 0, 1, 1], [], []>} : vector<2x32xf32>, vector<32x128xf32>, vector<2x128xf32> -> vector<2x128xf32>
    %93 = arith.addf %90, %92 : vector<2x128xf32>
    %94 = arith.addf %93, %8 : vector<2x128xf32>
    %95 = vector.extract_strided_slice %94 {offsets = [0, 0], sizes = [2, 96], strides = [1, 1]} : vector<2x128xf32> to vector<2x96xf32>
    %96 = arith.negf %95 : vector<2x96xf32>
    %97 = math.exp %96 : vector<2x96xf32>
    %cst_45 = arith.constant 1.000000e+00 : f32
    %98 = vector.broadcast %cst_45 : f32 to vector<2x96xf32>
    %99 = arith.addf %98, %97 : vector<2x96xf32>
    %100 = arith.divf %98, %99 : vector<2x96xf32>
    %101 = vector.extract_strided_slice %94 {offsets = [0, 96], sizes = [2, 32], strides = [1, 1]} : vector<2x128xf32> to vector<2x32xf32>
    %102 = math.tanh %101 : vector<2x32xf32>
    %103 = vector.extract_strided_slice %100 {offsets = [0, 0], sizes = [2, 32], strides = [1, 1]} : vector<2x96xf32> to vector<2x32xf32>
    %104 = vector.extract_strided_slice %100 {offsets = [0, 32], sizes = [2, 32], strides = [1, 1]} : vector<2x96xf32> to vector<2x32xf32>
    %105 = vector.extract_strided_slice %100 {offsets = [0, 64], sizes = [2, 32], strides = [1, 1]} : vector<2x96xf32> to vector<2x32xf32>
    %106 = arith.mulf %104, %57 : vector<2x32xf32>
    %107 = arith.mulf %103, %102 : vector<2x32xf32>
    %108 = arith.addf %106, %107 : vector<2x32xf32>
    %109 = math.tanh %108 : vector<2x32xf32>
    %110 = arith.mulf %105, %109 : vector<2x32xf32>
    %111 = arith.index_cast %c1_i32 : i32 to index
    %c0_46 = arith.constant 0 : index
    %c0_47 = arith.constant 0 : index
    %112 = vector.load %arg8[%111, %c0_46, %c0_47] : memref<4x2x32xf32, #tpu.memory_space<vmem>>, vector<1x2x32xf32>
    %113 = vector.shape_cast %112 : vector<1x2x32xf32> to vector<2x32xf32>
    %114 = vector.shape_cast %110 : vector<2x32xf32> to vector<1x2x32xf32>
    tpu.vector_store %arg8[%111, %c0_46, %c0_47], %114 {strides = array<i32>} : memref<4x2x32xf32, #tpu.memory_space<vmem>>, vector<1x2x32xf32>,
    %c2_i32 = arith.constant 2 : i32
    %115 = arith.index_cast %c2_i32 : i32 to index
    %c0_48 = arith.constant 0 : index
    %c0_49 = arith.constant 0 : index
    %116 = vector.load %arg1[%115, %c0_48, %c0_49] : memref<4x2x4xf32, #tpu.memory_space<vmem>>, vector<1x2x4xf32>
    %117 = vector.shape_cast %116 : vector<1x2x4xf32> to vector<2x4xf32>
    %c0_50 = arith.constant 0 : index
    %c0_51 = arith.constant 0 : index
    %118 = vector.load %arg2[%c0_50, %c0_51] : memref<4x256xf32, #tpu.memory_space<vmem>>, vector<4x256xf32>
    %cst_52 = arith.constant dense<0.000000e+00> : vector<2x256xf32>
    %119 = tpu.matmul %117, %118, %cst_52 {dimension_numbers = #tpu.dot_dimension_numbers<[1], [0], [0], [1], [0, 0, 1, 1], [], []>} : vector<2x4xf32>, vector<4x256xf32>, vector<2x256xf32> -> vector<2x256xf32>
    %c0_53 = arith.constant 0 : index
    %c0_54 = arith.constant 0 : index
    %120 = vector.load %arg3[%c0_53, %c0_54] : memref<64x256xf32, #tpu.memory_space<vmem>>, vector<64x256xf32>
    %cst_55 = arith.constant dense<0.000000e+00> : vector<2x256xf32>
    %121 = tpu.matmul %88, %120, %cst_55 {dimension_numbers = #tpu.dot_dimension_numbers<[1], [0], [0], [1], [0, 0, 1, 1], [], []>} : vector<2x64xf32>, vector<64x256xf32>, vector<2x256xf32> -> vector<2x256xf32>
    %122 = arith.addf %119, %121 : vector<2x256xf32>
    %123 = arith.addf %122, %5 : vector<2x256xf32>
    %124 = vector.extract_strided_slice %123 {offsets = [0, 0], sizes = [2, 192], strides = [1, 1]} : vector<2x256xf32> to vector<2x192xf32>
    %125 = arith.negf %124 : vector<2x192xf32>
    %126 = math.exp %125 : vector<2x192xf32>
    %cst_56 = arith.constant 1.000000e+00 : f32
    %127 = vector.broadcast %cst_56 : f32 to vector<2x192xf32>
    %128 = arith.addf %127, %126 : vector<2x192xf32>
    %129 = arith.divf %127, %128 : vector<2x192xf32>
    %130 = vector.extract_strided_slice %123 {offsets = [0, 192], sizes = [2, 64], strides = [1, 1]} : vector<2x256xf32> to vector<2x64xf32>
    %131 = math.tanh %130 : vector<2x64xf32>
    %132 = vector.extract_strided_slice %129 {offsets = [0, 0], sizes = [2, 64], strides = [1, 1]} : vector<2x192xf32> to vector<2x64xf32>
    %133 = vector.extract_strided_slice %129 {offsets = [0, 64], sizes = [2, 64], strides = [1, 1]} : vector<2x192xf32> to vector<2x64xf32>
    %134 = vector.extract_strided_slice %129 {offsets = [0, 128], sizes = [2, 64], strides = [1, 1]} : vector<2x192xf32> to vector<2x64xf32>
    %135 = arith.mulf %133, %86 : vector<2x64xf32>
    %136 = arith.mulf %132, %131 : vector<2x64xf32>
    %137 = arith.addf %135, %136 : vector<2x64xf32>
    %138 = math.tanh %137 : vector<2x64xf32>
    %139 = arith.mulf %134, %138 : vector<2x64xf32>
    %c0_57 = arith.constant 0 : index
    %c0_58 = arith.constant 0 : index
    %140 = vector.load %arg5[%c0_57, %c0_58] : memref<64x128xf32, #tpu.memory_space<vmem>>, vector<64x128xf32>
    %cst_59 = arith.constant dense<0.000000e+00> : vector<2x128xf32>
    %141 = tpu.matmul %139, %140, %cst_59 {dimension_numbers = #tpu.dot_dimension_numbers<[1], [0], [0], [1], [0, 0, 1, 1], [], []>} : vector<2x64xf32>, vector<64x128xf32>, vector<2x128xf32> -> vector<2x128xf32>
    %c0_60 = arith.constant 0 : index
    %c0_61 = arith.constant 0 : index
    %142 = vector.load %arg6[%c0_60, %c0_61] : memref<32x128xf32, #tpu.memory_space<vmem>>, vector<32x128xf32>
    %cst_62 = arith.constant dense<0.000000e+00> : vector<2x128xf32>
    %143 = tpu.matmul %110, %142, %cst_62 {dimension_numbers = #tpu.dot_dimension_numbers<[1], [0], [0], [1], [0, 0, 1, 1], [], []>} : vector<2x32xf32>, vector<32x128xf32>, vector<2x128xf32> -> vector<2x128xf32>
    %144 = arith.addf %141, %143 : vector<2x128xf32>
    %145 = arith.addf %144, %8 : vector<2x128xf32>
    %146 = vector.extract_strided_slice %145 {offsets = [0, 0], sizes = [2, 96], strides = [1, 1]} : vector<2x128xf32> to vector<2x96xf32>
    %147 = arith.negf %146 : vector<2x96xf32>
    %148 = math.exp %147 : vector<2x96xf32>
    %cst_63 = arith.constant 1.000000e+00 : f32
    %149 = vector.broadcast %cst_63 : f32 to vector<2x96xf32>
    %150 = arith.addf %149, %148 : vector<2x96xf32>
    %151 = arith.divf %149, %150 : vector<2x96xf32>
    %152 = vector.extract_strided_slice %145 {offsets = [0, 96], sizes = [2, 32], strides = [1, 1]} : vector<2x128xf32> to vector<2x32xf32>
    %153 = math.tanh %152 : vector<2x32xf32>
    %154 = vector.extract_strided_slice %151 {offsets = [0, 0], sizes = [2, 32], strides = [1, 1]} : vector<2x96xf32> to vector<2x32xf32>
    %155 = vector.extract_strided_slice %151 {offsets = [0, 32], sizes = [2, 32], strides = [1, 1]} : vector<2x96xf32> to vector<2x32xf32>
    %156 = vector.extract_strided_slice %151 {offsets = [0, 64], sizes = [2, 32], strides = [1, 1]} : vector<2x96xf32> to vector<2x32xf32>
    %157 = arith.mulf %155, %108 : vector<2x32xf32>
    %158 = arith.mulf %154, %153 : vector<2x32xf32>
    %159 = arith.addf %157, %158 : vector<2x32xf32>
    %160 = math.tanh %159 : vector<2x32xf32>
    %161 = arith.mulf %156, %160 : vector<2x32xf32>
    %162 = arith.index_cast %c2_i32 : i32 to index
    %c0_64 = arith.constant 0 : index
    %c0_65 = arith.constant 0 : index
    %163 = vector.load %arg8[%162, %c0_64, %c0_65] : memref<4x2x32xf32, #tpu.memory_space<vmem>>, vector<1x2x32xf32>
    %164 = vector.shape_cast %163 : vector<1x2x32xf32> to vector<2x32xf32>
    %165 = vector.shape_cast %161 : vector<2x32xf32> to vector<1x2x32xf32>
    tpu.vector_store %arg8[%162, %c0_64, %c0_65], %165 {strides = array<i32>} : memref<4x2x32xf32, #tpu.memory_space<vmem>>, vector<1x2x32xf32>,
    %c3_i32 = arith.constant 3 : i32
    %166 = arith.index_cast %c3_i32 : i32 to index
    %c0_66 = arith.constant 0 : index
    %c0_67 = arith.constant 0 : index
    %167 = vector.load %arg1[%166, %c0_66, %c0_67] : memref<4x2x4xf32, #tpu.memory_space<vmem>>, vector<1x2x4xf32>
    %168 = vector.shape_cast %167 : vector<1x2x4xf32> to vector<2x4xf32>
    %c0_68 = arith.constant 0 : index
    %c0_69 = arith.constant 0 : index
    %169 = vector.load %arg2[%c0_68, %c0_69] : memref<4x256xf32, #tpu.memory_space<vmem>>, vector<4x256xf32>
    %cst_70 = arith.constant dense<0.000000e+00> : vector<2x256xf32>
    %170 = tpu.matmul %168, %169, %cst_70 {dimension_numbers = #tpu.dot_dimension_numbers<[1], [0], [0], [1], [0, 0, 1, 1], [], []>} : vector<2x4xf32>, vector<4x256xf32>, vector<2x256xf32> -> vector<2x256xf32>
    %c0_71 = arith.constant 0 : index
    %c0_72 = arith.constant 0 : index
    %171 = vector.load %arg3[%c0_71, %c0_72] : memref<64x256xf32, #tpu.memory_space<vmem>>, vector<64x256xf32>
    %cst_73 = arith.constant dense<0.000000e+00> : vector<2x256xf32>
    %172 = tpu.matmul %139, %171, %cst_73 {dimension_numbers = #tpu.dot_dimension_numbers<[1], [0], [0], [1], [0, 0, 1, 1], [], []>} : vector<2x64xf32>, vector<64x256xf32>, vector<2x256xf32> -> vector<2x256xf32>
    %173 = arith.addf %170, %172 : vector<2x256xf32>
    %174 = arith.addf %173, %5 : vector<2x256xf32>
    %175 = vector.extract_strided_slice %174 {offsets = [0, 0], sizes = [2, 192], strides = [1, 1]} : vector<2x256xf32> to vector<2x192xf32>
    %176 = arith.negf %175 : vector<2x192xf32>
    %177 = math.exp %176 : vector<2x192xf32>
    %cst_74 = arith.constant 1.000000e+00 : f32
    %178 = vector.broadcast %cst_74 : f32 to vector<2x192xf32>
    %179 = arith.addf %178, %177 : vector<2x192xf32>
    %180 = arith.divf %178, %179 : vector<2x192xf32>
    %181 = vector.extract_strided_slice %174 {offsets = [0, 192], sizes = [2, 64], strides = [1, 1]} : vector<2x256xf32> to vector<2x64xf32>
    %182 = math.tanh %181 : vector<2x64xf32>
    %183 = vector.extract_strided_slice %180 {offsets = [0, 0], sizes = [2, 64], strides = [1, 1]} : vector<2x192xf32> to vector<2x64xf32>
    %184 = vector.extract_strided_slice %180 {offsets = [0, 64], sizes = [2, 64], strides = [1, 1]} : vector<2x192xf32> to vector<2x64xf32>
    %185 = vector.extract_strided_slice %180 {offsets = [0, 128], sizes = [2, 64], strides = [1, 1]} : vector<2x192xf32> to vector<2x64xf32>
    %186 = arith.mulf %184, %137 : vector<2x64xf32>
    %187 = arith.mulf %183, %182 : vector<2x64xf32>
    %188 = arith.addf %186, %187 : vector<2x64xf32>
    %189 = math.tanh %188 : vector<2x64xf32>
    %190 = arith.mulf %185, %189 : vector<2x64xf32>
    %c0_75 = arith.constant 0 : index
    %c0_76 = arith.constant 0 : index
    %191 = vector.load %arg5[%c0_75, %c0_76] : memref<64x128xf32, #tpu.memory_space<vmem>>, vector<64x128xf32>
    %cst_77 = arith.constant dense<0.000000e+00> : vector<2x128xf32>
    %192 = tpu.matmul %190, %191, %cst_77 {dimension_numbers = #tpu.dot_dimension_numbers<[1], [0], [0], [1], [0, 0, 1, 1], [], []>} : vector<2x64xf32>, vector<64x128xf32>, vector<2x128xf32> -> vector<2x128xf32>
    %c0_78 = arith.constant 0 : index
    %c0_79 = arith.constant 0 : index
    %193 = vector.load %arg6[%c0_78, %c0_79] : memref<32x128xf32, #tpu.memory_space<vmem>>, vector<32x128xf32>
    %cst_80 = arith.constant dense<0.000000e+00> : vector<2x128xf32>
    %194 = tpu.matmul %161, %193, %cst_80 {dimension_numbers = #tpu.dot_dimension_numbers<[1], [0], [0], [1], [0, 0, 1, 1], [], []>} : vector<2x32xf32>, vector<32x128xf32>, vector<2x128xf32> -> vector<2x128xf32>
    %195 = arith.addf %192, %194 : vector<2x128xf32>
    %196 = arith.addf %195, %8 : vector<2x128xf32>
    %197 = vector.extract_strided_slice %196 {offsets = [0, 0], sizes = [2, 96], strides = [1, 1]} : vector<2x128xf32> to vector<2x96xf32>
    %198 = arith.negf %197 : vector<2x96xf32>
    %199 = math.exp %198 : vector<2x96xf32>
    %cst_81 = arith.constant 1.000000e+00 : f32
    %200 = vector.broadcast %cst_81 : f32 to vector<2x96xf32>
    %201 = arith.addf %200, %199 : vector<2x96xf32>
    %202 = arith.divf %200, %201 : vector<2x96xf32>
    %203 = vector.extract_strided_slice %196 {offsets = [0, 96], sizes = [2, 32], strides = [1, 1]} : vector<2x128xf32> to vector<2x32xf32>
    %204 = math.tanh %203 : vector<2x32xf32>
    %205 = vector.extract_strided_slice %202 {offsets = [0, 0], sizes = [2, 32], strides = [1, 1]} : vector<2x96xf32> to vector<2x32xf32>
    %206 = vector.extract_strided_slice %202 {offsets = [0, 32], sizes = [2, 32], strides = [1, 1]} : vector<2x96xf32> to vector<2x32xf32>
    %207 = vector.extract_strided_slice %202 {offsets = [0, 64], sizes = [2, 32], strides = [1, 1]} : vector<2x96xf32> to vector<2x32xf32>
    %208 = arith.mulf %206, %159 : vector<2x32xf32>
    %209 = arith.mulf %205, %204 : vector<2x32xf32>
    %210 = arith.addf %208, %209 : vector<2x32xf32>
    %211 = math.tanh %210 : vector<2x32xf32>
    %212 = arith.mulf %207, %211 : vector<2x32xf32>
    %213 = arith.index_cast %c3_i32 : i32 to index
    %c0_82 = arith.constant 0 : index
    %c0_83 = arith.constant 0 : index
    %214 = vector.load %arg8[%213, %c0_82, %c0_83] : memref<4x2x32xf32, #tpu.memory_space<vmem>>, vector<1x2x32xf32>
    %215 = vector.shape_cast %214 : vector<1x2x32xf32> to vector<2x32xf32>
    %216 = vector.shape_cast %212 : vector<2x32xf32> to vector<1x2x32xf32>
    tpu.vector_store %arg8[%213, %c0_82, %c0_83], %216 {strides = array<i32>} : memref<4x2x32xf32, #tpu.memory_space<vmem>>, vector<1x2x32xf32>,
    %c4_i32 = arith.constant 4 : i32
    %c0_84 = arith.constant 0 : index
    %c0_85 = arith.constant 0 : index
    %217 = vector.load %arg9[%c0_84, %c0_85] : memref<2x64xf32, #tpu.memory_space<vmem>>, vector<2x64xf32>
    tpu.vector_store %arg9[%c0_84, %c0_85], %190 {strides = array<i32>} : memref<2x64xf32, #tpu.memory_space<vmem>>, vector<2x64xf32>,
    %c0_86 = arith.constant 0 : index
    %c0_87 = arith.constant 0 : index
    %218 = vector.load %arg10[%c0_86, %c0_87] : memref<2x64xf32, #tpu.memory_space<vmem>>, vector<2x64xf32>
    tpu.vector_store %arg10[%c0_86, %c0_87], %188 {strides = array<i32>} : memref<2x64xf32, #tpu.memory_space<vmem>>, vector<2x64xf32>,
    %c0_88 = arith.constant 0 : index
    %c0_89 = arith.constant 0 : index
    %219 = vector.load %arg11[%c0_88, %c0_89] : memref<2x32xf32, #tpu.memory_space<vmem>>, vector<2x32xf32>
    tpu.vector_store %arg11[%c0_88, %c0_89], %212 {strides = array<i32>} : memref<2x32xf32, #tpu.memory_space<vmem>>, vector<2x32xf32>,
    %c0_90 = arith.constant 0 : index
    %c0_91 = arith.constant 0 : index
    %220 = vector.load %arg12[%c0_90, %c0_91] : memref<2x32xf32, #tpu.memory_space<vmem>>, vector<2x32xf32>
    tpu.vector_store %arg12[%c0_90, %c0_91], %210 {strides = array<i32>} : memref<2x32xf32, #tpu.memory_space<vmem>>, vector<2x32xf32>,
    return
  }
  func.func @transform_0(%arg0: i32) -> (i32, i32, i32) {
    %c0_i32 = arith.constant 0 : i32
    %c0_i32_0 = arith.constant 0 : i32
    %c0_i32_1 = arith.constant 0 : i32
    return %arg0, %c0_i32, %c0_i32_0 : i32, i32, i32
  }
  func.func @transform_1(%arg0: i32) -> (i32, i32) {
    %c0_i32 = arith.constant 0 : i32
    %c0_i32_0 = arith.constant 0 : i32
    %c0_i32_1 = arith.constant 0 : i32
    return %c0_i32, %c0_i32_0 : i32, i32
  }
  func.func @transform_2(%arg0: i32) -> (i32, i32) {
    %c0_i32 = arith.constant 0 : i32
    %c0_i32_0 = arith.constant 0 : i32
    %c0_i32_1 = arith.constant 0 : i32
    return %c0_i32, %c0_i32_0 : i32, i32
  }
  func.func @transform_3(%arg0: i32) -> (i32, i32) {
    %c0_i32 = arith.constant 0 : i32
    %c0_i32_0 = arith.constant 0 : i32
    %c0_i32_1 = arith.constant 0 : i32
    return %c0_i32, %c0_i32_0 : i32, i32
  }
  func.func @transform_4(%arg0: i32) -> (i32, i32) {
    %c0_i32 = arith.constant 0 : i32
    %c0_i32_0 = arith.constant 0 : i32
    %c0_i32_1 = arith.constant 0 : i32
    return %c0_i32, %c0_i32_0 : i32, i32
  }
  func.func @transform_5(%arg0: i32) -> (i32, i32) {
    %c0_i32 = arith.constant 0 : i32
    %c0_i32_0 = arith.constant 0 : i32
    %c0_i32_1 = arith.constant 0 : i32
    return %c0_i32, %c0_i32_0 : i32, i32
  }
  func.func @transform_6(%arg0: i32) -> (i32, i32) {
    %c0_i32 = arith.constant 0 : i32
    %c0_i32_0 = arith.constant 0 : i32
    %c0_i32_1 = arith.constant 0 : i32
    return %c0_i32, %c0_i32_0 : i32, i32
  }
  func.func @transform_7(%arg0: i32) -> (i32, i32, i32) {
    %c0_i32 = arith.constant 0 : i32
    %c0_i32_0 = arith.constant 0 : i32
    %c0_i32_1 = arith.constant 0 : i32
    return %arg0, %c0_i32, %c0_i32_0 : i32, i32, i32
  }
}

</mosaic_0001>

<llo_original>
// kernel: tpu_custom_call.1
$region0: #{tpu_custom_call.1}
  #allocation0 [shape = 'u32[]', space=smem, size = 0x4, offset = 0x4, fixed_abs, tag = 'smem constant byte address 0x4 - core index']
  #allocation1 [shape = 'u32[144,128]{1,0:T(1,128)}', space=vmem, size = 0x12000, scoped, tag = 'internal scratch']
  #allocation2 [shape = 'f32[2,64]{1,0:T(2,128)}', space=vmem, size = 0x400, scoped, tag = 'scratch operand']
  #allocation3 [shape = 'f32[2,64]{1,0:T(2,128)}', space=vmem, size = 0x400, scoped, tag = 'scratch operand']
  #allocation4 [shape = 'f32[2,32]{1,0:T(2,128)}', space=vmem, size = 0x400, scoped, tag = 'scratch operand']
  #allocation5 [shape = 'f32[2,32]{1,0:T(2,128)}', space=vmem, size = 0x400, scoped, tag = 'scratch operand']
  %s0 = inlined_call_operand.vmem [shape: f32[8,2,4], index: 0, kind: input, shape index: {}]
  %s1 = inlined_call_operand.vmem [shape: f32[4,256], index: 1, kind: input, shape index: {}]
  %s2 = inlined_call_operand.hbm [shape: f32[64,256], index: 2, kind: input, shape index: {}]
  %s3 = inlined_call_operand.vmem [shape: f32[1,256], index: 3, kind: input, shape index: {}]
  %s4 = inlined_call_operand.hbm [shape: f32[64,128], index: 4, kind: input, shape index: {}]
  %s5 = inlined_call_operand.vmem [shape: f32[32,128], index: 5, kind: input, shape index: {}]
  %s6 = inlined_call_operand.vmem [shape: f32[1,128], index: 6, kind: input, shape index: {}]
  %s7 = inlined_call_operand.hbm [shape: f32[8,2,32], index: 7, kind: output, shape index: {}]
  %s8 = sld [smem:[#allocation0]]
  $region73: #{tpu_custom_call.1} parent=0
    _
  %s10 = ssub.s32 1, %s8
  %s11 = scalar_select 0, %s10, %s8
  $region1: #{tpu_custom_call.1} parent=0
    #allocation6 [shape = 'u8[65536]{0}', space=vmem, size = 0x10000, scoped, tag = 'input window, operand 2, single buffered']
    #allocation7 [shape = 's32[2]{0}', space=sflag, size = 0x8, scoped, tag = 'scoped memory for tpu_custom_call.1']
    #allocation8 [shape = 's32[2]{0}', space=sflag, size = 0x8, scoped, tag = 'scoped memory for tpu_custom_call.1']
    #allocation9 [shape = 'u8[32768]{0}', space=vmem, size = 0x8000, scoped, tag = 'input window, operand 4, single buffered']
    #allocation10 [shape = 's32[1]{0}', space=sflag, size = 0x4, scoped, tag = 'scoped memory for tpu_custom_call.1']
    #allocation11 [shape = 'u8[8192]{0}', space=vmem, size = 0x2000, scoped, tag = 'output window, operand 0']
    %12 = vsyncpa [#allocation7], 0
    %13 = vsyncpa [#allocation10], 0
    %14 = vsyncpa [#allocation8], 0
    %s15 = scalar_lea.sflag [#allocation8], 1
    %16 = vsyncpa %s15, 0
    loop: start=0, step=1, limit=4
    $region2: #{tpu_custom_call.1} parent=1 // loop_pre_header
      _
    $region3: #{tpu_custom_call.1} parent=1 // loop_header
      %s18 = sphi 0, %s22
      %p19 = scmp.ge.s32.totalorder %s18, 4
      %s28 = sphi 0, %s30
      %s31 = sphi 0, %s28
      %s32 = sphi 0, %s31
      %s48 = sphi 0, %s32
      %s52 = sphi 0, %s52
      %s54 = sphi 0, %s52
      %s55 = sphi 0, %s54
      %s69 = sphi 0, %s55
      %s73 = sphi 0, %s73
      %s75 = sphi 0, %s73
      %s76 = sphi 0, %s75
      %s90 = sphi 0, %s76
      %s94 = sphi 0, %s94
      %s96 = sphi 0, %s94
      %s97 = sphi 0, %s96
      %s111 = sphi 0, %s97
      %s115 = sphi 0, %s115
      %s117 = sphi 0, %s115
      %s118 = sphi 0, %s117
      %s132 = sphi 0, %s118
      %s136 = sphi 0, %s136
      %s138 = sphi 0, %s136
      %s139 = sphi 0, %s138
      %s153 = sphi 0, %s139
      %s157 = sphi 0, %s157
      %s159 = sphi 0, %s157
      %s160 = sphi 0, %s159
      %s174 = sphi 0, %s160
      %s180 = sphi 0, %s182
      %s183 = sphi 0, %s180
      %s184 = sphi 0, %s183
      %s200 = sphi 0, %s184
    $region4: #{tpu_custom_call.1} parent=1 // loop_header_branch
      %21 = sbr.rel (%p19) target = $region8
    $region5: #{tpu_custom_call.1} parent=1 // loop_body
      %s23 = ssub.s32 %s18, 1
      %s24 = ssub.s32 %s18, 2
      %s25 = sadd.s32 %s18, 1
      %s26 = ssub.s32 %s18, %s25
      %p27 = scmp.eq.s32.totalorder %s26, 0
      %s29 = sadd.s32 %s28, 1
      %s30 = scalar_select %p27, %s28, %s29
      %p33 = pneg %p27
      %p34 = scmp.eq.s32.totalorder %s18, 1
      %p35 = por %p33, %p34
      %p36 = scmp.ne.s32.totalorder %s28, %s31
      %p37 = scmp.eq.s32.totalorder %s18, 0
      %p38 = por %p36, %p37
      %p39 = scmp.ne.s32.totalorder %s28, %s31
      %p40 = scmp.eq.s32.totalorder %s23, 1
      %p41 = por %p39, %p40
      %p42 = scmp.ne.s32.totalorder %s31, %s32
      %p43 = scmp.eq.s32.totalorder %s23, 0
      %p44 = por %p42, %p43
      %p45 = scmp.ne.s32.totalorder %s31, %s32
      %p46 = scmp.eq.s32.totalorder %s24, 1
      %p47 = por %p45, %p46
      %p49 = scmp.ne.s32.totalorder %s32, %s48
      %p50 = scmp.eq.s32.totalorder %s24, 0
      %p51 = por %p49, %p50
      %s53 = sadd.s32 %s52, 1
      %p56 = scmp.eq.s32.totalorder %s18, 1
      %p57 = scmp.ne.s32.totalorder %s52, %s54
      %p58 = scmp.eq.s32.totalorder %s18, 0
      %p59 = por %p57, %p58
      %p60 = scmp.ne.s32.totalorder %s52, %s54
      %p61 = scmp.eq.s32.totalorder %s23, 1
      %p62 = por %p60, %p61
      %p63 = scmp.ne.s32.totalorder %s54, %s55
      %p64 = scmp.eq.s32.totalorder %s23, 0
      %p65 = por %p63, %p64
      %p66 = scmp.ne.s32.totalorder %s54, %s55
      %p67 = scmp.eq.s32.totalorder %s24, 1
      %p68 = por %p66, %p67
      %p70 = scmp.ne.s32.totalorder %s55, %s69
      %p71 = scmp.eq.s32.totalorder %s24, 0
      %p72 = por %p70, %p71
      %s74 = sadd.s32 %s73, 1
      %p77 = scmp.eq.s32.totalorder %s18, 1
      %p78 = scmp.ne.s32.totalorder %s73, %s75
      %p79 = scmp.eq.s32.totalorder %s18, 0
      %p80 = por %p78, %p79
      %p81 = scmp.ne.s32.totalorder %s73, %s75
      %p82 = scmp.eq.s32.totalorder %s23, 1
      %p83 = por %p81, %p82
      %p84 = scmp.ne.s32.totalorder %s75, %s76
      %p85 = scmp.eq.s32.totalorder %s23, 0
      %p86 = por %p84, %p85
      %p87 = scmp.ne.s32.totalorder %s75, %s76
      %p88 = scmp.eq.s32.totalorder %s24, 1
      %p89 = por %p87, %p88
      %p91 = scmp.ne.s32.totalorder %s76, %s90
      %p92 = scmp.eq.s32.totalorder %s24, 0
      %p93 = por %p91, %p92
      %s95 = sadd.s32 %s94, 1
      %p98 = scmp.eq.s32.totalorder %s18, 1
      %p99 = scmp.ne.s32.totalorder %s94, %s96
      %p100 = scmp.eq.s32.totalorder %s18, 0
      %p101 = por %p99, %p100
      %p102 = scmp.ne.s32.totalorder %s94, %s96
      %p103 = scmp.eq.s32.totalorder %s23, 1
      %p104 = por %p102, %p103
      %p105 = scmp.ne.s32.totalorder %s96, %s97
      %p106 = scmp.eq.s32.totalorder %s23, 0
      %p107 = por %p105, %p106
      %p108 = scmp.ne.s32.totalorder %s96, %s97
      %p109 = scmp.eq.s32.totalorder %s24, 1
      %p110 = por %p108, %p109
      %p112 = scmp.ne.s32.totalorder %s97, %s111
      %p113 = scmp.eq.s32.totalorder %s24, 0
      %p114 = por %p112, %p113
      %s116 = sadd.s32 %s115, 1
      %p119 = scmp.eq.s32.totalorder %s18, 1
      %p120 = scmp.ne.s32.totalorder %s115, %s117
      %p121 = scmp.eq.s32.totalorder %s18, 0
      %p122 = por %p120, %p121
      %p123 = scmp.ne.s32.totalorder %s115, %s117
      %p124 = scmp.eq.s32.totalorder %s23, 1
      %p125 = por %p123, %p124
      %p126 = scmp.ne.s32.totalorder %s117, %s118
      %p127 = scmp.eq.s32.totalorder %s23, 0
      %p128 = por %p126, %p127
      %p129 = scmp.ne.s32.totalorder %s117, %s118
      %p130 = scmp.eq.s32.totalorder %s24, 1
      %p131 = por %p129, %p130
      %p133 = scmp.ne.s32.totalorder %s118, %s132
      %p134 = scmp.eq.s32.totalorder %s24, 0
      %p135 = por %p133, %p134
      %s137 = sadd.s32 %s136, 1
      %p140 = scmp.eq.s32.totalorder %s18, 1
      %p141 = scmp.ne.s32.totalorder %s136, %s138
      %p142 = scmp.eq.s32.totalorder %s18, 0
      %p143 = por %p141, %p142
      %p144 = scmp.ne.s32.totalorder %s136, %s138
      %p145 = scmp.eq.s32.totalorder %s23, 1
      %p146 = por %p144, %p145
      %p147 = scmp.ne.s32.totalorder %s138, %s139
      %p148 = scmp.eq.s32.totalorder %s23, 0
      %p149 = por %p147, %p148
      %p150 = scmp.ne.s32.totalorder %s138, %s139
      %p151 = scmp.eq.s32.totalorder %s24, 1
      %p152 = por %p150, %p151
      %p154 = scmp.ne.s32.totalorder %s139, %s153
      %p155 = scmp.eq.s32.totalorder %s24, 0
      %p156 = por %p154, %p155
      %s158 = sadd.s32 %s157, 1
      %p161 = scmp.eq.s32.totalorder %s18, 1
      %p162 = scmp.ne.s32.totalorder %s157, %s159
      %p163 = scmp.eq.s32.totalorder %s18, 0
      %p164 = por %p162, %p163
      %p165 = scmp.ne.s32.totalorder %s157, %s159
      %p166 = scmp.eq.s32.totalorder %s23, 1
      %p167 = por %p165, %p166
      %p168 = scmp.ne.s32.totalorder %s159, %s160
      %p169 = scmp.eq.s32.totalorder %s23, 0
      %p170 = por %p168, %p169
      %p171 = scmp.ne.s32.totalorder %s159, %s160
      %p172 = scmp.eq.s32.totalorder %s24, 1
      %p173 = por %p171, %p172
      %p175 = scmp.ne.s32.totalorder %s160, %s174
      %p176 = scmp.eq.s32.totalorder %s24, 0
      %p177 = por %p175, %p176
      %s178 = ssub.s32 %s18, %s25
      %p179 = scmp.eq.s32.totalorder %s178, 0
      %s181 = sadd.s32 %s180, 1
      %s182 = scalar_select %p179, %s180, %s181
      %p185 = pneg %p179
      %p186 = scmp.eq.s32.totalorder %s18, 1
      %p187 = por %p185, %p186
      %p188 = scmp.ne.s32.totalorder %s180, %s183
      %p189 = scmp.eq.s32.totalorder %s18, 0
      %p190 = por %p188, %p189
      %p191 = scmp.ne.s32.totalorder %s180, %s183
      %p192 = scmp.eq.s32.totalorder %s23, 1
      %p193 = por %p191, %p192
      %p194 = scmp.ne.s32.totalorder %s183, %s184
      %p195 = scmp.eq.s32.totalorder %s23, 0
      %p196 = por %p194, %p195
      %p197 = scmp.ne.s32.totalorder %s183, %s184
      %p198 = scmp.eq.s32.totalorder %s24, 1
      %p199 = por %p197, %p198
      %p201 = scmp.ne.s32.totalorder %s184, %s200
      %p202 = scmp.eq.s32.totalorder %s24, 0
      %p203 = por %p201, %p202
      %p204 = scmp.le.s32.totalorder 1, %s18
      %p205 = scmp.lt.s32.totalorder %s18, 3
      %p206 = pnand %p204, %p205
      %p207 = pneg %p206
      // Predicated region
      $region9: #{tpu_custom_call.1} parent=5 // pred_check
        _
      $region10: #{tpu_custom_call.1} parent=5 // pred_check_branch
        %209 = sbr.rel (%p206) target = $region12
      $region11: #{tpu_custom_call.1} parent=5 // pred_region
        %s210 = ssub.s32 %s18, 1
        // Predicated region
        $region13: #{tpu_custom_call.1} parent=11 // pred_check
          %p211 = pneg %p65
        $region14: #{tpu_custom_call.1} parent=11 // pred_check_branch
          %213 = sbr.rel (%p211) target = $region16
        $region15: #{tpu_custom_call.1} parent=11 // pred_region
          _
        $region16: #{tpu_custom_call.1} parent=11 // pred_fallthru
          _
        // Predicated region
        $region17: #{tpu_custom_call.1} parent=11 // pred_check
          %p214 = pneg %p86
        $region18: #{tpu_custom_call.1} parent=11 // pred_check_branch
          %216 = sbr.rel (%p214) target = $region20
        $region19: #{tpu_custom_call.1} parent=11 // pred_region
          %s218 = ssub.s32 2048, 2048
          %219 = vsyncadd [#allocation7], %s218
          %s220 = sshll.u32 [#allocation6], 4
          %s221 = int_to_ptr.vmem [resolvable:$true] %s220
          %226 = dma.hbm_to_vmem [thread:$0]  %s2, 2048, %s221, [#allocation7], 256, 256, 16
        $region20: #{tpu_custom_call.1} parent=11 // pred_fallthru
          _
        // Predicated region
        $region21: #{tpu_custom_call.1} parent=11 // pred_check
          %p227 = pneg %p107
        $region22: #{tpu_custom_call.1} parent=11 // pred_check_branch
          %229 = sbr.rel (%p227) target = $region24
        $region23: #{tpu_custom_call.1} parent=11 // pred_region
          _
        $region24: #{tpu_custom_call.1} parent=11 // pred_fallthru
          _
        // Predicated region
        $region25: #{tpu_custom_call.1} parent=11 // pred_check
          %p230 = pneg %p128
        $region26: #{tpu_custom_call.1} parent=11 // pred_check_branch
          %232 = sbr.rel (%p230) target = $region28
        $region27: #{tpu_custom_call.1} parent=11 // pred_region
          %s234 = ssub.s32 1024, 1024
          %235 = vsyncadd [#allocation10], %s234
          %s236 = sshll.u32 [#allocation9], 4
          %s237 = int_to_ptr.vmem [resolvable:$true] %s236
          %242 = dma.hbm_to_vmem [thread:$0]  %s4, 1024, %s237, [#allocation10], 128, 128, 8
        $region28: #{tpu_custom_call.1} parent=11 // pred_fallthru
          _
        // Predicated region
        $region29: #{tpu_custom_call.1} parent=11 // pred_check
          %p243 = pneg %p149
        $region30: #{tpu_custom_call.1} parent=11 // pred_check_branch
          %245 = sbr.rel (%p243) target = $region32
        $region31: #{tpu_custom_call.1} parent=11 // pred_region
          _
        $region32: #{tpu_custom_call.1} parent=11 // pred_fallthru
          _
        // Predicated region
        $region33: #{tpu_custom_call.1} parent=11 // pred_check
          %p246 = pneg %p170
        $region34: #{tpu_custom_call.1} parent=11 // pred_check_branch
          %248 = sbr.rel (%p246) target = $region36
        $region35: #{tpu_custom_call.1} parent=11 // pred_region
          _
        $region36: #{tpu_custom_call.1} parent=11 // pred_fallthru
          _
      $region12: #{tpu_custom_call.1} parent=5 // pred_fallthru
        _
      %p249 = scmp.lt.s32.totalorder %s18, 2
      // Predicated region
      $region37: #{tpu_custom_call.1} parent=5 // pred_check
        %p250 = pneg %p249
      $region38: #{tpu_custom_call.1} parent=5 // pred_check_branch
        %252 = sbr.rel (%p250) target = $region40
      $region39: #{tpu_custom_call.1} parent=5 // pred_region
        // Predicated region
        $region41: #{tpu_custom_call.1} parent=39 // pred_check
          %p253 = pneg %p38
        $region42: #{tpu_custom_call.1} parent=39 // pred_check_branch
          %255 = sbr.rel (%p253) target = $region44
        $region43: #{tpu_custom_call.1} parent=39 // pred_region
          %s256 = smul.u32 4, %s18
          %p257 = scmp.lt.s32.totalorder %s256, 7
          %s258 = scalar_select %p257, %s256, 7
          %s259 = smul.addr %s258, 2
          %s260 = scalar_lea.vmem %s0, %s259
          %s261 = smul.u32 4, %s18
        $region44: #{tpu_custom_call.1} parent=39 // pred_fallthru
          _
      $region40: #{tpu_custom_call.1} parent=5 // pred_fallthru
        _
      %p262 = scmp.le.s32.totalorder 1, %s18
      %p263 = scmp.lt.s32.totalorder %s18, 3
      %p264 = pnand %p262, %p263
      %p265 = pneg %p264
      // Predicated region
      $region45: #{tpu_custom_call.1} parent=5 // pred_check
        _
      $region46: #{tpu_custom_call.1} parent=5 // pred_check_branch
        %267 = sbr.rel (%p264) target = $region48
      $region47: #{tpu_custom_call.1} parent=5 // pred_region
        %s268 = ssub.s32 %s18, 1
        // Predicated region
        $region49: #{tpu_custom_call.1} parent=47 // pred_check
          %p269 = pneg %p86
        $region50: #{tpu_custom_call.1} parent=47 // pred_check_branch
          %271 = sbr.rel (%p269) target = $region52
        $region51: #{tpu_custom_call.1} parent=47 // pred_region
          %272 = dma.done [#allocation7], 2048
        $region52: #{tpu_custom_call.1} parent=47 // pred_fallthru
          _
        // Predicated region
        $region53: #{tpu_custom_call.1} parent=47 // pred_check
          %p273 = pneg %p128
        $region54: #{tpu_custom_call.1} parent=47 // pred_check_branch
          %275 = sbr.rel (%p273) target = $region56
        $region55: #{tpu_custom_call.1} parent=47 // pred_region
          %276 = dma.done [#allocation10], 1024
        $region56: #{tpu_custom_call.1} parent=47 // pred_fallthru
          _
        %s277 = smul.u32 4, %s23
        %p278 = scmp.lt.s32.totalorder %s277, 7
        %s279 = scalar_select %p278, %s277, 7
        %s280 = smul.addr %s279, 2
        %s281 = scalar_lea.vmem %s0, %s280
        %p282 = pneg %p44
        %p283 = pneg %p41
        %p284 = pneg %p65
        %p285 = pneg %p62
        %p286 = pneg %p86
        %p287 = pneg %p83
        %p288 = pneg %p107
        %p289 = pneg %p104
        %p290 = pneg %p128
        %p291 = pneg %p125
        %p292 = pneg %p149
        %p293 = pneg %p146
        %p294 = pneg %p170
        %p295 = pneg %p167
        %p296 = pneg %p196
        %p297 = pneg %p193
        %s298 = sand.u32 %s183, 1
        %s299 = scalar_lea.sflag [#allocation8], %s298
        %s300 = sand.u32 %s183, 1
        %s301 = smul.addr %s300, 8
        %s302 = scalar_lea.vmem [#allocation11], %s301
        %s303 = smul.u32 4, %s23
        %p304 = scmp.lt.s32.totalorder %s303, 7
        %s305 = scalar_select %p304, %s303, 7
        %s306 = smul.addr %s305, 2
        %s307 = scalar_lea.vmem %s0, %s306
        %s308 = smul.u32 4, %s23
        %s309 = smul.u32 4, %s23
        %p310 = scmp.eq.s32.totalorder %s23, 0
        // Predicated region
        $region57: #{tpu_custom_call.1} parent=47 // pred_check
          %p311 = pneg %p310
        $region58: #{tpu_custom_call.1} parent=47 // pred_check_branch
          %313 = sbr.rel (%p311) target = $region60
        $region59: #{tpu_custom_call.1} parent=47 // pred_region
          %vm314 = vcmask 517120
          %315 = vst.msk [vmem:[#allocation2] sm:$0x3] %vm314, 0.0
          %316 = vst.msk [vmem:[#allocation3] sm:$0x3] %vm314, 0.0
          %vm317 = vcmask 254976
          %318 = vst.msk [vmem:[#allocation4] sm:$0x3] %vm317, 0.0
          %319 = vst.msk [vmem:[#allocation5] sm:$0x3] %vm317, 0.0
        $region60: #{tpu_custom_call.1} parent=47 // pred_fallthru
          _
        %v320 = vld [vmem:[%s3] sm:$0x3]
        %v322 = vlaneseq
        %v323 = vshrl.u32 %v322, 7
        %v324 = vsub.s32 0, %v323
        %v325 = vrot.slane %v320, %v324
        %v326 = vlaneseq
        %v327 = vshrl.u32 %v326, 7
        %v328 = vsub.s32 1, %v327
        %v329 = vrot.slane %v320, %v328
        %v332 = vld [vmem:[%s6] sm:$0x1]
        %v334 = vlaneseq
        %v335 = vshrl.u32 %v334, 7
        %v336 = vsub.s32 0, %v335
        %v337 = vrot.slane %v332, %v336
        %v339 = vld [vmem:[#allocation2] sm:$0x3]
        %v340 = vld [vmem:[#allocation3] sm:$0x3]
        %v341 = vld [vmem:[#allocation4] sm:$0x3]
        %v342 = vld [vmem:[#allocation5] sm:$0x3]
        %v343 = vld [vmem:[%s307] sm:$0x3]
        %v344 = vld [vmem:[%s1] sm:$0xff]
        %v345 = vld [vmem:[#allocation6] sm:$0xff]
        %v346 = vld [vmem:[#allocation6 + $0x8] sm:$0xff]
        %v347 = vld [vmem:[#allocation6 + $0x10] sm:$0xff]
        %v348 = vld [vmem:[#allocation6 + $0x18] sm:$0xff]
        %v349 = vld [vmem:[#allocation6 + $0x20] sm:$0xff]
        %v350 = vld [vmem:[#allocation6 + $0x28] sm:$0xff]
        %v351 = vld [vmem:[#allocation6 + $0x30] sm:$0xff]
        %v352 = vld [vmem:[#allocation6 + $0x38] sm:$0xff]
        %v353 = vld [vmem:[#allocation6 + $0x40] sm:$0xff]
        %v354 = vld [vmem:[#allocation6 + $0x48] sm:$0xff]
        %v355 = vld [vmem:[#allocation6 + $0x50] sm:$0xff]
        %v356 = vld [vmem:[#allocation6 + $0x58] sm:$0xff]
        %v357 = vld [vmem:[#allocation6 + $0x60] sm:$0xff]
        %v358 = vld [vmem:[#allocation6 + $0x68] sm:$0xff]
        %v359 = vld [vmem:[#allocation6 + $0x70] sm:$0xff]
        %v360 = vld [vmem:[#allocation6 + $0x78] sm:$0xff]
        %vm361 = vcmask 523264
        %v363 = vsel %vm361, %v339, 0
        %365 = vmatprep.subr.mxu0 %v346
        %366 = vmatpush1.msra.mxu0 %v345
        %367 = vmatprep.subr.mxu0 %v348
        %368 = vmatpush1.msra.mxu0 %v347
        %369 = vmatprep.subr.mxu0 %v350
        %370 = vmatpush1.msra.mxu0 %v349
        %371 = vmatprep.subr.mxu0 %v352
        %372 = vmatpush1.msra.mxu0 %v351
        %373 = vmatprep.subr.mxu0 %v354
        %374 = vmatpush1.msra.mxu0 %v353
        %375 = vmatprep.subr.mxu0 %v356
        %376 = vmatpush1.msra.mxu0 %v355
        %377 = vmatprep.subr.mxu0 %v358
        %378 = vmatpush1.msra.mxu0 %v357
        %379 = vmatprep.subr.mxu0 %v360
        %380 = vmatpush1.msra.mxu0 %v359
        %381 = vmatprep.subr.mxu0 0.0
        %382 = vmatpush1.msra.mxu0 0.0
        %383 = vmatprep.subr.mxu0 0.0
        %384 = vmatpush1.msra.mxu0 0.0
        %385 = vmatprep.subr.mxu0 0.0
        %386 = vmatpush1.msra.mxu0 0.0
        %387 = vmatprep.subr.mxu0 0.0
        %388 = vmatpush1.msra.mxu0 0.0
        %389 = vmatprep.subr.mxu0 0.0
        %390 = vmatpush1.msra.mxu0 0.0
        %391 = vmatprep.subr.mxu0 0.0
        %392 = vmatpush1.msra.mxu0 0.0
        %393 = vmatprep.subr.mxu0 0.0
        %394 = vmatpush1.msra.mxu0 0.0
        %395 = vmatprep.subr.mxu0 0.0
        %396 = vmatpush1.msra.mxu0 0.0
        %397 = vmatprep.subr.mxu0 0.0
        %398 = vmatpush1.msra.mxu0 0.0
        %399 = vmatprep.subr.mxu0 0.0
        %400 = vmatpush1.msra.mxu0 0.0
        %401 = vmatprep.subr.mxu0 0.0
        %402 = vmatpush1.msra.mxu0 0.0
        %403 = vmatprep.subr.mxu0 0.0
        %404 = vmatpush1.msra.mxu0 0.0
        %405 = vmatprep.subr.mxu0 0.0
        %406 = vmatpush1.msra.mxu0 0.0
        %407 = vmatprep.subr.mxu0 0.0
        %408 = vmatpush1.msra.mxu0 0.0
        %409 = vmatprep.subr.mxu0 0.0
        %410 = vmatpush1.msra.mxu0 0.0
        %411 = vmatprep.subr.mxu0 0.0
        %412 = vmatpush1.msra.mxu0 0.0
        %413 = vmatprep.subr.mxu0 0.0
        %414 = vmatpush1.msra.mxu0 0.0
        %415 = vmatprep.subr.mxu0 0.0
        %416 = vmatpush1.msra.mxu0 0.0
        %417 = vmatprep.subr.mxu0 0.0
        %418 = vmatpush1.msra.mxu0 0.0
        %419 = vmatprep.subr.mxu0 0.0
        %420 = vmatpush1.msra.mxu0 0.0
        %421 = vmatprep.subr.mxu0 0.0
        %422 = vmatpush1.msra.mxu0 0.0
        %423 = vmatprep.subr.mxu0 0.0
        %424 = vmatpush1.msra.mxu0 0.0
        %425 = vmatprep.subr.mxu0 0.0
        %426 = vmatpush1.msra.mxu0 0.0
        %427 = vmatprep.subr.mxu0 0.0
        %428 = vmatpush1.msra.mxu0 0.0
        %429 = vmatprep.mubr.f32.mxu0 0.0
        %430 = vmatmul.mubr.f32.gmra.mrb[0].mxu0 %v363
        %v431 = vpop.f32.mrb[0].mxu0
        %v432 = vadd.f32 0.0, %v431
        %v433 = vpop.f32.mrb[0].mxu0
        %v434 = vadd.f32 0.0, %v433
        %435 = vdwg.mxu0
        %v437 = vcombine.high %v344, %v344
        %vm438 = vcmask 31744
        %v440 = vsel %vm438, %v343, 0
        %vm442 = vcmask 1043456
        %v443 = vsel %vm442, %v344, 0
        %v445 = vsel %vm442, %v437, 0
        %447 = vmatprep.subr.mxu0 %v445
        %448 = vmatpush1.msra.mxu0 %v443
        %449 = vmatprep.subr.mxu0 0.0
        %450 = vmatpush1.msra.mxu0 0.0
        %451 = vmatprep.subr.mxu0 0.0
        %452 = vmatpush1.msra.mxu0 0.0
        %453 = vmatprep.subr.mxu0 0.0
        %454 = vmatpush1.msra.mxu0 0.0
        %455 = vmatprep.subr.mxu0 0.0
        %456 = vmatpush1.msra.mxu0 0.0
        %457 = vmatprep.subr.mxu0 0.0
        %458 = vmatpush1.msra.mxu0 0.0
        %459 = vmatprep.subr.mxu0 0.0
        %460 = vmatpush1.msra.mxu0 0.0
        %461 = vmatprep.subr.mxu0 0.0
        %462 = vmatpush1.msra.mxu0 0.0
        %463 = vmatprep.subr.mxu0 0.0
        %464 = vmatpush1.msra.mxu0 0.0
        %465 = vmatprep.subr.mxu0 0.0
        %466 = vmatpush1.msra.mxu0 0.0
        %467 = vmatprep.subr.mxu0 0.0
        %468 = vmatpush1.msra.mxu0 0.0
        %469 = vmatprep.subr.mxu0 0.0
        %470 = vmatpush1.msra.mxu0 0.0
        %471 = vmatprep.subr.mxu0 0.0
        %472 = vmatpush1.msra.mxu0 0.0
        %473 = vmatprep.subr.mxu0 0.0
        %474 = vmatpush1.msra.mxu0 0.0
        %475 = vmatprep.subr.mxu0 0.0
        %476 = vmatpush1.msra.mxu0 0.0
        %477 = vmatprep.subr.mxu0 0.0
        %478 = vmatpush1.msra.mxu0 0.0
        %479 = vmatprep.subr.mxu0 0.0
        %480 = vmatpush1.msra.mxu0 0.0
        %481 = vmatprep.subr.mxu0 0.0
        %482 = vmatpush1.msra.mxu0 0.0
        %483 = vmatprep.subr.mxu0 0.0
        %484 = vmatpush1.msra.mxu0 0.0
        %485 = vmatprep.subr.mxu0 0.0
        %486 = vmatpush1.msra.mxu0 0.0
        %487 = vmatprep.subr.mxu0 0.0
        %488 = vmatpush1.msra.mxu0 0.0
        %489 = vmatprep.subr.mxu0 0.0
        %490 = vmatpush1.msra.mxu0 0.0
        %491 = vmatprep.subr.mxu0 0.0
        %492 = vmatpush1.msra.mxu0 0.0
        %493 = vmatprep.subr.mxu0 0.0
        %494 = vmatpush1.msra.mxu0 0.0
        %495 = vmatprep.subr.mxu0 0.0
        %496 = vmatpush1.msra.mxu0 0.0
        %497 = vmatprep.subr.mxu0 0.0
        %498 = vmatpush1.msra.mxu0 0.0
        %499 = vmatprep.subr.mxu0 0.0
        %500 = vmatpush1.msra.mxu0 0.0
        %501 = vmatprep.subr.mxu0 0.0
        %502 = vmatpush1.msra.mxu0 0.0
        %503 = vmatprep.subr.mxu0 0.0
        %504 = vmatpush1.msra.mxu0 0.0
        %505 = vmatprep.subr.mxu0 0.0
        %506 = vmatpush1.msra.mxu0 0.0
        %507 = vmatprep.subr.mxu0 0.0
        %508 = vmatpush1.msra.mxu0 0.0
        %509 = vmatprep.subr.mxu0 0.0
        %510 = vmatpush1.msra.mxu0 0.0
        %511 = vmatprep.mubr.f32.mxu0 0.0
        %512 = vmatmul.mubr.f32.gmra.mrb[0].mxu0 %v440
        %v513 = vpop.f32.mrb[0].mxu0
        %v514 = vadd.f32 %v432, %v513
        %v515 = vpop.f32.mrb[0].mxu0
        %v516 = vadd.f32 %v434, %v515
        %517 = vdwg.mxu0
        %v518 = vadd.f32 %v514, %v325
        %v519 = vadd.f32 %v516, %v329
        %v520 = vxor.u32 %v518, 2147483648
        %v521 = vxor.u32 %v519, 2147483648
        %v522 = vmul.f32 %v520, 1.442695
        %v523 = vpow.pop %v522
        %v524 = vmul.f32 %v521, 1.442695
        %v525 = vpow.pop %v524
        %v526 = vadd.f32 %v523, 1.0
        %v527 = vadd.f32 %v525, 1.0
        %v528 = vrcp.pop %v526
        %v529 = vmul.f32 1.0, %v528
        %v530 = vrcp.pop %v527
        %v531 = vmul.f32 1.0, %v530
        %v532 = vtanh.pop %v519
        %534 = vrot.lane.b32.xlu0 %v340, 64
        %v535 = vpop.permute.xlu0 %534
        %v537 = vmul.f32 %v529, %v535
        %539 = vrot.lane.b32.xlu0 %v532, 64
        %v540 = vpop.permute.xlu0 %539
        %v542 = vmul.f32 %v529, %v540
        %544 = vrot.lane.b32.xlu0 %v542, 64
        %v545 = vpop.permute.xlu0 %544
        %v547 = vadd.f32 %v537, %v545
        %v548 = vtanh.pop %v547
        %550 = vrot.lane.b32.xlu0 %v548, 64
        %v551 = vpop.permute.xlu0 %550
        %v553 = vmul.f32 %v531, %v551
        %v554 = vld [vmem:[#allocation9] sm:$0xff]
        %v555 = vld [vmem:[#allocation9 + $0x8] sm:$0xff]
        %v556 = vld [vmem:[#allocation9 + $0x10] sm:$0xff]
        %v557 = vld [vmem:[#allocation9 + $0x18] sm:$0xff]
        %v558 = vld [vmem:[#allocation9 + $0x20] sm:$0xff]
        %v559 = vld [vmem:[#allocation9 + $0x28] sm:$0xff]
        %v560 = vld [vmem:[#allocation9 + $0x30] sm:$0xff]
        %v561 = vld [vmem:[#allocation9 + $0x38] sm:$0xff]
        %v562 = vld [vmem:[%s5] sm:$0xff]
        %v563 = vld [vmem:[%s5 + $0x8] sm:$0xff]
        %v564 = vld [vmem:[%s5 + $0x10] sm:$0xff]
        %v565 = vld [vmem:[%s5 + $0x18] sm:$0xff]
        %vm566 = vcmask 261120
        %v568 = vsel %vm566, %v341, 0
        %570 = vmatprep.subr.mxu0 0.0
        %571 = vmatpush1.msra.mxu0 %v562
        %572 = vmatprep.subr.mxu0 0.0
        %573 = vmatpush1.msra.mxu0 %v563
        %574 = vmatprep.subr.mxu0 0.0
        %575 = vmatpush1.msra.mxu0 %v564
        %576 = vmatprep.subr.mxu0 0.0
        %577 = vmatpush1.msra.mxu0 %v565
        %578 = vmatprep.subr.mxu0 0.0
        %579 = vmatpush1.msra.mxu0 0.0
        %580 = vmatprep.subr.mxu0 0.0
        %581 = vmatpush1.msra.mxu0 0.0
        %582 = vmatprep.subr.mxu0 0.0
        %583 = vmatpush1.msra.mxu0 0.0
        %584 = vmatprep.subr.mxu0 0.0
        %585 = vmatpush1.msra.mxu0 0.0
        %586 = vmatprep.subr.mxu0 0.0
        %587 = vmatpush1.msra.mxu0 0.0
        %588 = vmatprep.subr.mxu0 0.0
        %589 = vmatpush1.msra.mxu0 0.0
        %590 = vmatprep.subr.mxu0 0.0
        %591 = vmatpush1.msra.mxu0 0.0
        %592 = vmatprep.subr.mxu0 0.0
        %593 = vmatpush1.msra.mxu0 0.0
        %594 = vmatprep.subr.mxu0 0.0
        %595 = vmatpush1.msra.mxu0 0.0
        %596 = vmatprep.subr.mxu0 0.0
        %597 = vmatpush1.msra.mxu0 0.0
        %598 = vmatprep.subr.mxu0 0.0
        %599 = vmatpush1.msra.mxu0 0.0
        %600 = vmatprep.subr.mxu0 0.0
        %601 = vmatpush1.msra.mxu0 0.0
        %602 = vmatprep.subr.mxu0 0.0
        %603 = vmatpush1.msra.mxu0 0.0
        %604 = vmatprep.subr.mxu0 0.0
        %605 = vmatpush1.msra.mxu0 0.0
        %606 = vmatprep.subr.mxu0 0.0
        %607 = vmatpush1.msra.mxu0 0.0
        %608 = vmatprep.subr.mxu0 0.0
        %609 = vmatpush1.msra.mxu0 0.0
        %610 = vmatprep.subr.mxu0 0.0
        %611 = vmatpush1.msra.mxu0 0.0
        %612 = vmatprep.subr.mxu0 0.0
        %613 = vmatpush1.msra.mxu0 0.0
        %614 = vmatprep.subr.mxu0 0.0
        %615 = vmatpush1.msra.mxu0 0.0
        %616 = vmatprep.subr.mxu0 0.0
        %617 = vmatpush1.msra.mxu0 0.0
        %618 = vmatprep.subr.mxu0 0.0
        %619 = vmatpush1.msra.mxu0 0.0
        %620 = vmatprep.subr.mxu0 0.0
        %621 = vmatpush1.msra.mxu0 0.0
        %622 = vmatprep.subr.mxu0 0.0
        %623 = vmatpush1.msra.mxu0 0.0
        %624 = vmatprep.subr.mxu0 0.0
        %625 = vmatpush1.msra.mxu0 0.0
        %626 = vmatprep.subr.mxu0 0.0
        %627 = vmatpush1.msra.mxu0 0.0
        %628 = vmatprep.subr.mxu0 0.0
        %629 = vmatpush1.msra.mxu0 0.0
        %630 = vmatprep.subr.mxu0 0.0
        %631 = vmatpush1.msra.mxu0 0.0
        %632 = vmatprep.subr.mxu0 0.0
        %633 = vmatpush1.msra.mxu0 0.0
        %634 = vmatprep.mubr.f32.mxu0 0.0
        %635 = vmatmul.mubr.f32.gmra.mrb[0].mxu0 %v568
        %v636 = vpop.f32.mrb[0].mxu0
        %v637 = vadd.f32 0.0, %v636
        %v638 = vpop.f32.mrb[0].mxu0
        %639 = vdwg.mxu0
        %v641 = vsel %vm361, %v553, 0
        %643 = vmatprep.subr.mxu0 0.0
        %644 = vmatpush1.msra.mxu0 %v554
        %645 = vmatprep.subr.mxu0 0.0
        %646 = vmatpush1.msra.mxu0 %v555
        %647 = vmatprep.subr.mxu0 0.0
        %648 = vmatpush1.msra.mxu0 %v556
        %649 = vmatprep.subr.mxu0 0.0
        %650 = vmatpush1.msra.mxu0 %v557
        %651 = vmatprep.subr.mxu0 0.0
        %652 = vmatpush1.msra.mxu0 %v558
        %653 = vmatprep.subr.mxu0 0.0
        %654 = vmatpush1.msra.mxu0 %v559
        %655 = vmatprep.subr.mxu0 0.0
        %656 = vmatpush1.msra.mxu0 %v560
        %657 = vmatprep.subr.mxu0 0.0
        %658 = vmatpush1.msra.mxu0 %v561
        %659 = vmatprep.subr.mxu0 0.0
        %660 = vmatpush1.msra.mxu0 0.0
        %661 = vmatprep.subr.mxu0 0.0
        %662 = vmatpush1.msra.mxu0 0.0
        %663 = vmatprep.subr.mxu0 0.0
        %664 = vmatpush1.msra.mxu0 0.0
        %665 = vmatprep.subr.mxu0 0.0
        %666 = vmatpush1.msra.mxu0 0.0
        %667 = vmatprep.subr.mxu0 0.0
        %668 = vmatpush1.msra.mxu0 0.0
        %669 = vmatprep.subr.mxu0 0.0
        %670 = vmatpush1.msra.mxu0 0.0
        %671 = vmatprep.subr.mxu0 0.0
        %672 = vmatpush1.msra.mxu0 0.0
        %673 = vmatprep.subr.mxu0 0.0
        %674 = vmatpush1.msra.mxu0 0.0
        %675 = vmatprep.subr.mxu0 0.0
        %676 = vmatpush1.msra.mxu0 0.0
        %677 = vmatprep.subr.mxu0 0.0
        %678 = vmatpush1.msra.mxu0 0.0
        %679 = vmatprep.subr.mxu0 0.0
        %680 = vmatpush1.msra.mxu0 0.0
        %681 = vmatprep.subr.mxu0 0.0
        %682 = vmatpush1.msra.mxu0 0.0
        %683 = vmatprep.subr.mxu0 0.0
        %684 = vmatpush1.msra.mxu0 0.0
        %685 = vmatprep.subr.mxu0 0.0
        %686 = vmatpush1.msra.mxu0 0.0
        %687 = vmatprep.subr.mxu0 0.0
        %688 = vmatpush1.msra.mxu0 0.0
        %689 = vmatprep.subr.mxu0 0.0
        %690 = vmatpush1.msra.mxu0 0.0
        %691 = vmatprep.subr.mxu0 0.0
        %692 = vmatpush1.msra.mxu0 0.0
        %693 = vmatprep.subr.mxu0 0.0
        %694 = vmatpush1.msra.mxu0 0.0
        %695 = vmatprep.subr.mxu0 0.0
        %696 = vmatpush1.msra.mxu0 0.0
        %697 = vmatprep.subr.mxu0 0.0
        %698 = vmatpush1.msra.mxu0 0.0
        %699 = vmatprep.subr.mxu0 0.0
        %700 = vmatpush1.msra.mxu0 0.0
        %701 = vmatprep.subr.mxu0 0.0
        %702 = vmatpush1.msra.mxu0 0.0
        %703 = vmatprep.subr.mxu0 0.0
        %704 = vmatpush1.msra.mxu0 0.0
        %705 = vmatprep.subr.mxu0 0.0
        %706 = vmatpush1.msra.mxu0 0.0
        %707 = vmatprep.mubr.f32.mxu0 0.0
        %708 = vmatmul.mubr.f32.gmra.mrb[0].mxu0 %v641
        %v709 = vpop.f32.mrb[0].mxu0
        %v710 = vadd.f32 %v637, %v709
        %v711 = vpop.f32.mrb[0].mxu0
        %712 = vdwg.mxu0
        %v713 = vadd.f32 %v710, %v337
        %v714 = vxor.u32 %v713, 2147483648
        %v715 = vmul.f32 %v714, 1.442695
        %v716 = vpow.pop %v715
        %v717 = vadd.f32 %v716, 1.0
        %v718 = vrcp.pop %v717
        %v719 = vmul.f32 1.0, %v718
        %v720 = vtanh.pop %v713
        %722 = vrot.lane.b32.xlu0 %v342, 32
        %v723 = vpop.permute.xlu0 %722
        %v725 = vmul.f32 %v719, %v723
        %727 = vrot.lane.b32.xlu0 %v720, 32
        %v728 = vpop.permute.xlu0 %727
        %v730 = vmul.f32 %v719, %v728
        %732 = vrot.lane.b32.xlu0 %v730, 32
        %v733 = vpop.permute.xlu0 %732
        %v735 = vadd.f32 %v725, %v733
        %v736 = vtanh.pop %v735
        %738 = vrot.lane.b32.xlu0 %v736, 32
        %v739 = vpop.permute.xlu0 %738
        %v741 = vmul.f32 %v719, %v739
        %743 = vrot.lane.b32.xlu0 %v741, 64
        %v744 = vpop.permute.xlu0 %743
        %vm746 = vcmask 254976
        %747 = vst.msk [vmem:[%s302] sm:$0x3] %vm746, %v744
        %s748 = scalar_lea.vmem %s307, 2
        %v749 = vld [vmem:[%s748] sm:$0x3]
        %v750 = vld [vmem:[%s1] sm:$0xff]
        %v751 = vld [vmem:[#allocation6] sm:$0xff]
        %v752 = vld [vmem:[#allocation6 + $0x8] sm:$0xff]
        %v753 = vld [vmem:[#allocation6 + $0x10] sm:$0xff]
        %v754 = vld [vmem:[#allocation6 + $0x18] sm:$0xff]
        %v755 = vld [vmem:[#allocation6 + $0x20] sm:$0xff]
        %v756 = vld [vmem:[#allocation6 + $0x28] sm:$0xff]
        %v757 = vld [vmem:[#allocation6 + $0x30] sm:$0xff]
        %v758 = vld [vmem:[#allocation6 + $0x38] sm:$0xff]
        %v759 = vld [vmem:[#allocation6 + $0x40] sm:$0xff]
        %v760 = vld [vmem:[#allocation6 + $0x48] sm:$0xff]
        %v761 = vld [vmem:[#allocation6 + $0x50] sm:$0xff]
        %v762 = vld [vmem:[#allocation6 + $0x58] sm:$0xff]
        %v763 = vld [vmem:[#allocation6 + $0x60] sm:$0xff]
        %v764 = vld [vmem:[#allocation6 + $0x68] sm:$0xff]
        %v765 = vld [vmem:[#allocation6 + $0x70] sm:$0xff]
        %v766 = vld [vmem:[#allocation6 + $0x78] sm:$0xff]
        %767 = vmatprep.subr.mxu0 %v752
        %768 = vmatpush1.msra.mxu0 %v751
        %769 = vmatprep.subr.mxu0 %v754
        %770 = vmatpush1.msra.mxu0 %v753
        %771 = vmatprep.subr.mxu0 %v756
        %772 = vmatpush1.msra.mxu0 %v755
        %773 = vmatprep.subr.mxu0 %v758
        %774 = vmatpush1.msra.mxu0 %v757
        %775 = vmatprep.subr.mxu0 %v760
        %776 = vmatpush1.msra.mxu0 %v759
        %777 = vmatprep.subr.mxu0 %v762
        %778 = vmatpush1.msra.mxu0 %v761
        %779 = vmatprep.subr.mxu0 %v764
        %780 = vmatpush1.msra.mxu0 %v763
        %781 = vmatprep.subr.mxu0 %v766
        %782 = vmatpush1.msra.mxu0 %v765
        %783 = vmatprep.subr.mxu0 0.0
        %784 = vmatpush1.msra.mxu0 0.0
        %785 = vmatprep.subr.mxu0 0.0
        %786 = vmatpush1.msra.mxu0 0.0
        %787 = vmatprep.subr.mxu0 0.0
        %788 = vmatpush1.msra.mxu0 0.0
        %789 = vmatprep.subr.mxu0 0.0
        %790 = vmatpush1.msra.mxu0 0.0
        %791 = vmatprep.subr.mxu0 0.0
        %792 = vmatpush1.msra.mxu0 0.0
        %793 = vmatprep.subr.mxu0 0.0
        %794 = vmatpush1.msra.mxu0 0.0
        %795 = vmatprep.subr.mxu0 0.0
        %796 = vmatpush1.msra.mxu0 0.0
        %797 = vmatprep.subr.mxu0 0.0
        %798 = vmatpush1.msra.mxu0 0.0
        %799 = vmatprep.subr.mxu0 0.0
        %800 = vmatpush1.msra.mxu0 0.0
        %801 = vmatprep.subr.mxu0 0.0
        %802 = vmatpush1.msra.mxu0 0.0
        %803 = vmatprep.subr.mxu0 0.0
        %804 = vmatpush1.msra.mxu0 0.0
        %805 = vmatprep.subr.mxu0 0.0
        %806 = vmatpush1.msra.mxu0 0.0
        %807 = vmatprep.subr.mxu0 0.0
        %808 = vmatpush1.msra.mxu0 0.0
        %809 = vmatprep.subr.mxu0 0.0
        %810 = vmatpush1.msra.mxu0 0.0
        %811 = vmatprep.subr.mxu0 0.0
        %812 = vmatpush1.msra.mxu0 0.0
        %813 = vmatprep.subr.mxu0 0.0
        %814 = vmatpush1.msra.mxu0 0.0
        %815 = vmatprep.subr.mxu0 0.0
        %816 = vmatpush1.msra.mxu0 0.0
        %817 = vmatprep.subr.mxu0 0.0
        %818 = vmatpush1.msra.mxu0 0.0
        %819 = vmatprep.subr.mxu0 0.0
        %820 = vmatpush1.msra.mxu0 0.0
        %821 = vmatprep.subr.mxu0 0.0
        %822 = vmatpush1.msra.mxu0 0.0
        %823 = vmatprep.subr.mxu0 0.0
        %824 = vmatpush1.msra.mxu0 0.0
        %825 = vmatprep.subr.mxu0 0.0
        %826 = vmatpush1.msra.mxu0 0.0
        %827 = vmatprep.subr.mxu0 0.0
        %828 = vmatpush1.msra.mxu0 0.0
        %829 = vmatprep.subr.mxu0 0.0
        %830 = vmatpush1.msra.mxu0 0.0
        %831 = vmatprep.mubr.f32.mxu0 0.0
        %832 = vmatmul.mubr.f32.gmra.mrb[0].mxu0 %v641
        %v833 = vpop.f32.mrb[0].mxu0
        %v834 = vadd.f32 0.0, %v833
        %v835 = vpop.f32.mrb[0].mxu0
        %v836 = vadd.f32 0.0, %v835
        %837 = vdwg.mxu0
        %v839 = vcombine.high %v750, %v750
        %v841 = vsel %vm438, %v749, 0
        %v843 = vsel %vm442, %v750, 0
        %v845 = vsel %vm442, %v839, 0
        %847 = vmatprep.subr.mxu0 %v845
        %848 = vmatpush1.msra.mxu0 %v843
        %849 = vmatprep.subr.mxu0 0.0
        %850 = vmatpush1.msra.mxu0 0.0
        %851 = vmatprep.subr.mxu0 0.0
        %852 = vmatpush1.msra.mxu0 0.0
        %853 = vmatprep.subr.mxu0 0.0
        %854 = vmatpush1.msra.mxu0 0.0
        %855 = vmatprep.subr.mxu0 0.0
        %856 = vmatpush1.msra.mxu0 0.0
        %857 = vmatprep.subr.mxu0 0.0
        %858 = vmatpush1.msra.mxu0 0.0
        %859 = vmatprep.subr.mxu0 0.0
        %860 = vmatpush1.msra.mxu0 0.0
        %861 = vmatprep.subr.mxu0 0.0
        %862 = vmatpush1.msra.mxu0 0.0
        %863 = vmatprep.subr.mxu0 0.0
        %864 = vmatpush1.msra.mxu0 0.0
        %865 = vmatprep.subr.mxu0 0.0
        %866 = vmatpush1.msra.mxu0 0.0
        %867 = vmatprep.subr.mxu0 0.0
        %868 = vmatpush1.msra.mxu0 0.0
        %869 = vmatprep.subr.mxu0 0.0
        %870 = vmatpush1.msra.mxu0 0.0
        %871 = vmatprep.subr.mxu0 0.0
        %872 = vmatpush1.msra.mxu0 0.0
        %873 = vmatprep.subr.mxu0 0.0
        %874 = vmatpush1.msra.mxu0 0.0
        %875 = vmatprep.subr.mxu0 0.0
        %876 = vmatpush1.msra.mxu0 0.0
        %877 = vmatprep.subr.mxu0 0.0
        %878 = vmatpush1.msra.mxu0 0.0
        %879 = vmatprep.subr.mxu0 0.0
        %880 = vmatpush1.msra.mxu0 0.0
        %881 = vmatprep.subr.mxu0 0.0
        %882 = vmatpush1.msra.mxu0 0.0
        %883 = vmatprep.subr.mxu0 0.0
        %884 = vmatpush1.msra.mxu0 0.0
        %885 = vmatprep.subr.mxu0 0.0
        %886 = vmatpush1.msra.mxu0 0.0
        %887 = vmatprep.subr.mxu0 0.0
        %888 = vmatpush1.msra.mxu0 0.0
        %889 = vmatprep.subr.mxu0 0.0
        %890 = vmatpush1.msra.mxu0 0.0
        %891 = vmatprep.subr.mxu0 0.0
        %892 = vmatpush1.msra.mxu0 0.0
        %893 = vmatprep.subr.mxu0 0.0
        %894 = vmatpush1.msra.mxu0 0.0
        %895 = vmatprep.subr.mxu0 0.0
        %896 = vmatpush1.msra.mxu0 0.0
        %897 = vmatprep.subr.mxu0 0.0
        %898 = vmatpush1.msra.mxu0 0.0
        %899 = vmatprep.subr.mxu0 0.0
        %900 = vmatpush1.msra.mxu0 0.0
        %901 = vmatprep.subr.mxu0 0.0
        %902 = vmatpush1.msra.mxu0 0.0
        %903 = vmatprep.subr.mxu0 0.0
        %904 = vmatpush1.msra.mxu0 0.0
        %905 = vmatprep.subr.mxu0 0.0
        %906 = vmatpush1.msra.mxu0 0.0
        %907 = vmatprep.subr.mxu0 0.0
        %908 = vmatpush1.msra.mxu0 0.0
        %909 = vmatprep.subr.mxu0 0.0
        %910 = vmatpush1.msra.mxu0 0.0
        %911 = vmatprep.mubr.f32.mxu0 0.0
        %912 = vmatmul.mubr.f32.gmra.mrb[0].mxu0 %v841
        %v913 = vpop.f32.mrb[0].mxu0
        %v914 = vadd.f32 %v834, %v913
        %v915 = vpop.f32.mrb[0].mxu0
        %v916 = vadd.f32 %v836, %v915
        %917 = vdwg.mxu0
        %v918 = vadd.f32 %v914, %v325
        %v919 = vadd.f32 %v916, %v329
        %v920 = vxor.u32 %v918, 2147483648
        %v921 = vxor.u32 %v919, 2147483648
        %v922 = vmul.f32 %v920, 1.442695
        %v923 = vpow.pop %v922
        %v924 = vmul.f32 %v921, 1.442695
        %v925 = vpow.pop %v924
        %v926 = vadd.f32 %v923, 1.0
        %v927 = vadd.f32 %v925, 1.0
        %v928 = vrcp.pop %v926
        %v929 = vmul.f32 1.0, %v928
        %v930 = vrcp.pop %v927
        %v931 = vmul.f32 1.0, %v930
        %v932 = vtanh.pop %v919
        %v933 = vmul.f32 %v929, %v547
        %935 = vrot.lane.b32.xlu0 %v932, 64
        %v936 = vpop.permute.xlu0 %935
        %v938 = vmul.f32 %v929, %v936
        %940 = vrot.lane.b32.xlu0 %v938, 64
        %v941 = vpop.permute.xlu0 %940
        %v943 = vadd.f32 %v933, %v941
        %v944 = vtanh.pop %v943
        %946 = vrot.lane.b32.xlu0 %v944, 64
        %v947 = vpop.permute.xlu0 %946
        %v949 = vmul.f32 %v931, %v947
        %v950 = vld [vmem:[#allocation9] sm:$0xff]
        %v951 = vld [vmem:[#allocation9 + $0x8] sm:$0xff]
        %v952 = vld [vmem:[#allocation9 + $0x10] sm:$0xff]
        %v953 = vld [vmem:[#allocation9 + $0x18] sm:$0xff]
        %v954 = vld [vmem:[#allocation9 + $0x20] sm:$0xff]
        %v955 = vld [vmem:[#allocation9 + $0x28] sm:$0xff]
        %v956 = vld [vmem:[#allocation9 + $0x30] sm:$0xff]
        %v957 = vld [vmem:[#allocation9 + $0x38] sm:$0xff]
        %v958 = vld [vmem:[%s5] sm:$0xff]
        %v959 = vld [vmem:[%s5 + $0x8] sm:$0xff]
        %v960 = vld [vmem:[%s5 + $0x10] sm:$0xff]
        %v961 = vld [vmem:[%s5 + $0x18] sm:$0xff]
        %v962 = vsel %vm566, %v744, 0
        %964 = vmatprep.subr.mxu0 0.0
        %965 = vmatpush1.msra.mxu0 %v958
        %966 = vmatprep.subr.mxu0 0.0
        %967 = vmatpush1.msra.mxu0 %v959
        %968 = vmatprep.subr.mxu0 0.0
        %969 = vmatpush1.msra.mxu0 %v960
        %970 = vmatprep.subr.mxu0 0.0
        %971 = vmatpush1.msra.mxu0 %v961
        %972 = vmatprep.subr.mxu0 0.0
        %973 = vmatpush1.msra.mxu0 0.0
        %974 = vmatprep.subr.mxu0 0.0
        %975 = vmatpush1.msra.mxu0 0.0
        %976 = vmatprep.subr.mxu0 0.0
        %977 = vmatpush1.msra.mxu0 0.0
        %978 = vmatprep.subr.mxu0 0.0
        %979 = vmatpush1.msra.mxu0 0.0
        %980 = vmatprep.subr.mxu0 0.0
        %981 = vmatpush1.msra.mxu0 0.0
        %982 = vmatprep.subr.mxu0 0.0
        %983 = vmatpush1.msra.mxu0 0.0
        %984 = vmatprep.subr.mxu0 0.0
        %985 = vmatpush1.msra.mxu0 0.0
        %986 = vmatprep.subr.mxu0 0.0
        %987 = vmatpush1.msra.mxu0 0.0
        %988 = vmatprep.subr.mxu0 0.0
        %989 = vmatpush1.msra.mxu0 0.0
        %990 = vmatprep.subr.mxu0 0.0
        %991 = vmatpush1.msra.mxu0 0.0
        %992 = vmatprep.subr.mxu0 0.0
        %993 = vmatpush1.msra.mxu0 0.0
        %994 = vmatprep.subr.mxu0 0.0
        %995 = vmatpush1.msra.mxu0 0.0
        %996 = vmatprep.subr.mxu0 0.0
        %997 = vmatpush1.msra.mxu0 0.0
        %998 = vmatprep.subr.mxu0 0.0
        %999 = vmatpush1.msra.mxu0 0.0
        %1000 = vmatprep.subr.mxu0 0.0
        %1001 = vmatpush1.msra.mxu0 0.0
        %1002 = vmatprep.subr.mxu0 0.0
        %1003 = vmatpush1.msra.mxu0 0.0
        %1004 = vmatprep.subr.mxu0 0.0
        %1005 = vmatpush1.msra.mxu0 0.0
        %1006 = vmatprep.subr.mxu0 0.0
        %1007 = vmatpush1.msra.mxu0 0.0
        %1008 = vmatprep.subr.mxu0 0.0
        %1009 = vmatpush1.msra.mxu0 0.0
        %1010 = vmatprep.subr.mxu0 0.0
        %1011 = vmatpush1.msra.mxu0 0.0
        %1012 = vmatprep.subr.mxu0 0.0
        %1013 = vmatpush1.msra.mxu0 0.0
        %1014 = vmatprep.subr.mxu0 0.0
        %1015 = vmatpush1.msra.mxu0 0.0
        %1016 = vmatprep.subr.mxu0 0.0
        %1017 = vmatpush1.msra.mxu0 0.0
        %1018 = vmatprep.subr.mxu0 0.0
        %1019 = vmatpush1.msra.mxu0 0.0
        %1020 = vmatprep.subr.mxu0 0.0
        %1021 = vmatpush1.msra.mxu0 0.0
        %1022 = vmatprep.subr.mxu0 0.0
        %1023 = vmatpush1.msra.mxu0 0.0
        %1024 = vmatprep.subr.mxu0 0.0
        %1025 = vmatpush1.msra.mxu0 0.0
        %1026 = vmatprep.subr.mxu0 0.0
        %1027 = vmatpush1.msra.mxu0 0.0
        %1028 = vmatprep.mubr.f32.mxu0 0.0
        %1029 = vmatmul.mubr.f32.gmra.mrb[0].mxu0 %v962
        %v1030 = vpop.f32.mrb[0].mxu0
        %v1031 = vadd.f32 0.0, %v1030
        %v1032 = vpop.f32.mrb[0].mxu0
        %1033 = vdwg.mxu0
        %v1035 = vsel %vm361, %v949, 0
        %1037 = vmatprep.subr.mxu0 0.0
        %1038 = vmatpush1.msra.mxu0 %v950
        %1039 = vmatprep.subr.mxu0 0.0
        %1040 = vmatpush1.msra.mxu0 %v951
        %1041 = vmatprep.subr.mxu0 0.0
        %1042 = vmatpush1.msra.mxu0 %v952
        %1043 = vmatprep.subr.mxu0 0.0
        %1044 = vmatpush1.msra.mxu0 %v953
        %1045 = vmatprep.subr.mxu0 0.0
        %1046 = vmatpush1.msra.mxu0 %v954
        %1047 = vmatprep.subr.mxu0 0.0
        %1048 = vmatpush1.msra.mxu0 %v955
        %1049 = vmatprep.subr.mxu0 0.0
        %1050 = vmatpush1.msra.mxu0 %v956
        %1051 = vmatprep.subr.mxu0 0.0
        %1052 = vmatpush1.msra.mxu0 %v957
        %1053 = vmatprep.subr.mxu0 0.0
        %1054 = vmatpush1.msra.mxu0 0.0
        %1055 = vmatprep.subr.mxu0 0.0
        %1056 = vmatpush1.msra.mxu0 0.0
        %1057 = vmatprep.subr.mxu0 0.0
        %1058 = vmatpush1.msra.mxu0 0.0
        %1059 = vmatprep.subr.mxu0 0.0
        %1060 = vmatpush1.msra.mxu0 0.0
        %1061 = vmatprep.subr.mxu0 0.0
        %1062 = vmatpush1.msra.mxu0 0.0
        %1063 = vmatprep.subr.mxu0 0.0
        %1064 = vmatpush1.msra.mxu0 0.0
        %1065 = vmatprep.subr.mxu0 0.0
        %1066 = vmatpush1.msra.mxu0 0.0
        %1067 = vmatprep.subr.mxu0 0.0
        %1068 = vmatpush1.msra.mxu0 0.0
        %1069 = vmatprep.subr.mxu0 0.0
        %1070 = vmatpush1.msra.mxu0 0.0
        %1071 = vmatprep.subr.mxu0 0.0
        %1072 = vmatpush1.msra.mxu0 0.0
        %1073 = vmatprep.subr.mxu0 0.0
        %1074 = vmatpush1.msra.mxu0 0.0
        %1075 = vmatprep.subr.mxu0 0.0
        %1076 = vmatpush1.msra.mxu0 0.0
        %1077 = vmatprep.subr.mxu0 0.0
        %1078 = vmatpush1.msra.mxu0 0.0
        %1079 = vmatprep.subr.mxu0 0.0
        %1080 = vmatpush1.msra.mxu0 0.0
        %1081 = vmatprep.subr.mxu0 0.0
        %1082 = vmatpush1.msra.mxu0 0.0
        %1083 = vmatprep.subr.mxu0 0.0
        %1084 = vmatpush1.msra.mxu0 0.0
        %1085 = vmatprep.subr.mxu0 0.0
        %1086 = vmatpush1.msra.mxu0 0.0
        %1087 = vmatprep.subr.mxu0 0.0
        %1088 = vmatpush1.msra.mxu0 0.0
        %1089 = vmatprep.subr.mxu0 0.0
        %1090 = vmatpush1.msra.mxu0 0.0
        %1091 = vmatprep.subr.mxu0 0.0
        %1092 = vmatpush1.msra.mxu0 0.0
        %1093 = vmatprep.subr.mxu0 0.0
        %1094 = vmatpush1.msra.mxu0 0.0
        %1095 = vmatprep.subr.mxu0 0.0
        %1096 = vmatpush1.msra.mxu0 0.0
        %1097 = vmatprep.subr.mxu0 0.0
        %1098 = vmatpush1.msra.mxu0 0.0
        %1099 = vmatprep.subr.mxu0 0.0
        %1100 = vmatpush1.msra.mxu0 0.0
        %1101 = vmatprep.mubr.f32.mxu0 0.0
        %1102 = vmatmul.mubr.f32.gmra.mrb[0].mxu0 %v1035
        %v1103 = vpop.f32.mrb[0].mxu0
        %v1104 = vadd.f32 %v1031, %v1103
        %v1105 = vpop.f32.mrb[0].mxu0
        %1106 = vdwg.mxu0
        %v1107 = vadd.f32 %v1104, %v337
        %v1108 = vxor.u32 %v1107, 2147483648
        %v1109 = vmul.f32 %v1108, 1.442695
        %v1110 = vpow.pop %v1109
        %v1111 = vadd.f32 %v1110, 1.0
        %v1112 = vrcp.pop %v1111
        %v1113 = vmul.f32 1.0, %v1112
        %v1114 = vtanh.pop %v1107
        %v1115 = vmul.f32 %v1113, %v735
        %1117 = vrot.lane.b32.xlu0 %v1114, 32
        %v1118 = vpop.permute.xlu0 %1117
        %v1120 = vmul.f32 %v1113, %v1118
        %1122 = vrot.lane.b32.xlu0 %v1120, 32
        %v1123 = vpop.permute.xlu0 %1122
        %v1125 = vadd.f32 %v1115, %v1123
        %v1126 = vtanh.pop %v1125
        %1128 = vrot.lane.b32.xlu0 %v1126, 32
        %v1129 = vpop.permute.xlu0 %1128
        %v1131 = vmul.f32 %v1113, %v1129
        %1133 = vrot.lane.b32.xlu0 %v1131, 64
        %v1134 = vpop.permute.xlu0 %1133
        %s1136 = scalar_lea.vmem %s302, 2 [#allocation11]
        %1137 = vst.msk [vmem:[%s1136] sm:$0x3] %vm746, %v1134
        %s1138 = scalar_lea.vmem %s307, 4
        %v1139 = vld [vmem:[%s1138] sm:$0x3]
        %v1140 = vld [vmem:[%s1] sm:$0xff]
        %v1141 = vld [vmem:[#allocation6] sm:$0xff]
        %v1142 = vld [vmem:[#allocation6 + $0x8] sm:$0xff]
        %v1143 = vld [vmem:[#allocation6 + $0x10] sm:$0xff]
        %v1144 = vld [vmem:[#allocation6 + $0x18] sm:$0xff]
        %v1145 = vld [vmem:[#allocation6 + $0x20] sm:$0xff]
        %v1146 = vld [vmem:[#allocation6 + $0x28] sm:$0xff]
        %v1147 = vld [vmem:[#allocation6 + $0x30] sm:$0xff]
        %v1148 = vld [vmem:[#allocation6 + $0x38] sm:$0xff]
        %v1149 = vld [vmem:[#allocation6 + $0x40] sm:$0xff]
        %v1150 = vld [vmem:[#allocation6 + $0x48] sm:$0xff]
        %v1151 = vld [vmem:[#allocation6 + $0x50] sm:$0xff]
        %v1152 = vld [vmem:[#allocation6 + $0x58] sm:$0xff]
        %v1153 = vld [vmem:[#allocation6 + $0x60] sm:$0xff]
        %v1154 = vld [vmem:[#allocation6 + $0x68] sm:$0xff]
        %v1155 = vld [vmem:[#allocation6 + $0x70] sm:$0xff]
        %v1156 = vld [vmem:[#allocation6 + $0x78] sm:$0xff]
        %1157 = vmatprep.subr.mxu0 %v1142
        %1158 = vmatpush1.msra.mxu0 %v1141
        %1159 = vmatprep.subr.mxu0 %v1144
        %1160 = vmatpush1.msra.mxu0 %v1143
        %1161 = vmatprep.subr.mxu0 %v1146
        %1162 = vmatpush1.msra.mxu0 %v1145
        %1163 = vmatprep.subr.mxu0 %v1148
        %1164 = vmatpush1.msra.mxu0 %v1147
        %1165 = vmatprep.subr.mxu0 %v1150
        %1166 = vmatpush1.msra.mxu0 %v1149
        %1167 = vmatprep.subr.mxu0 %v1152
        %1168 = vmatpush1.msra.mxu0 %v1151
        %1169 = vmatprep.subr.mxu0 %v1154
        %1170 = vmatpush1.msra.mxu0 %v1153
        %1171 = vmatprep.subr.mxu0 %v1156
        %1172 = vmatpush1.msra.mxu0 %v1155
        %1173 = vmatprep.subr.mxu0 0.0
        %1174 = vmatpush1.msra.mxu0 0.0
        %1175 = vmatprep.subr.mxu0 0.0
        %1176 = vmatpush1.msra.mxu0 0.0
        %1177 = vmatprep.subr.mxu0 0.0
        %1178 = vmatpush1.msra.mxu0 0.0
        %1179 = vmatprep.subr.mxu0 0.0
        %1180 = vmatpush1.msra.mxu0 0.0
        %1181 = vmatprep.subr.mxu0 0.0
        %1182 = vmatpush1.msra.mxu0 0.0
        %1183 = vmatprep.subr.mxu0 0.0
        %1184 = vmatpush1.msra.mxu0 0.0
        %1185 = vmatprep.subr.mxu0 0.0
        %1186 = vmatpush1.msra.mxu0 0.0
        %1187 = vmatprep.subr.mxu0 0.0
        %1188 = vmatpush1.msra.mxu0 0.0
        %1189 = vmatprep.subr.mxu0 0.0
        %1190 = vmatpush1.msra.mxu0 0.0
        %1191 = vmatprep.subr.mxu0 0.0
        %1192 = vmatpush1.msra.mxu0 0.0
        %1193 = vmatprep.subr.mxu0 0.0
        %1194 = vmatpush1.msra.mxu0 0.0
        %1195 = vmatprep.subr.mxu0 0.0
        %1196 = vmatpush1.msra.mxu0 0.0
        %1197 = vmatprep.subr.mxu0 0.0
        %1198 = vmatpush1.msra.mxu0 0.0
        %1199 = vmatprep.subr.mxu0 0.0
        %1200 = vmatpush1.msra.mxu0 0.0
        %1201 = vmatprep.subr.mxu0 0.0
        %1202 = vmatpush1.msra.mxu0 0.0
        %1203 = vmatprep.subr.mxu0 0.0
        %1204 = vmatpush1.msra.mxu0 0.0
        %1205 = vmatprep.subr.mxu0 0.0
        %1206 = vmatpush1.msra.mxu0 0.0
        %1207 = vmatprep.subr.mxu0 0.0
        %1208 = vmatpush1.msra.mxu0 0.0
        %1209 = vmatprep.subr.mxu0 0.0
        %1210 = vmatpush1.msra.mxu0 0.0
        %1211 = vmatprep.subr.mxu0 0.0
        %1212 = vmatpush1.msra.mxu0 0.0
        %1213 = vmatprep.subr.mxu0 0.0
        %1214 = vmatpush1.msra.mxu0 0.0
        %1215 = vmatprep.subr.mxu0 0.0
        %1216 = vmatpush1.msra.mxu0 0.0
        %1217 = vmatprep.subr.mxu0 0.0
        %1218 = vmatpush1.msra.mxu0 0.0
        %1219 = vmatprep.subr.mxu0 0.0
        %1220 = vmatpush1.msra.mxu0 0.0
        %1221 = vmatprep.mubr.f32.mxu0 0.0
        %1222 = vmatmul.mubr.f32.gmra.mrb[0].mxu0 %v1035
        %v1223 = vpop.f32.mrb[0].mxu0
        %v1224 = vadd.f32 0.0, %v1223
        %v1225 = vpop.f32.mrb[0].mxu0
        %v1226 = vadd.f32 0.0, %v1225
        %1227 = vdwg.mxu0
        %v1229 = vcombine.high %v1140, %v1140
        %v1231 = vsel %vm438, %v1139, 0
        %v1233 = vsel %vm442, %v1140, 0
        %v1235 = vsel %vm442, %v1229, 0
        %1237 = vmatprep.subr.mxu0 %v1235
        %1238 = vmatpush1.msra.mxu0 %v1233
        %1239 = vmatprep.subr.mxu0 0.0
        %1240 = vmatpush1.msra.mxu0 0.0
        %1241 = vmatprep.subr.mxu0 0.0
        %1242 = vmatpush1.msra.mxu0 0.0
        %1243 = vmatprep.subr.mxu0 0.0
        %1244 = vmatpush1.msra.mxu0 0.0
        %1245 = vmatprep.subr.mxu0 0.0
        %1246 = vmatpush1.msra.mxu0 0.0
        %1247 = vmatprep.subr.mxu0 0.0
        %1248 = vmatpush1.msra.mxu0 0.0
        %1249 = vmatprep.subr.mxu0 0.0
        %1250 = vmatpush1.msra.mxu0 0.0
        %1251 = vmatprep.subr.mxu0 0.0
        %1252 = vmatpush1.msra.mxu0 0.0
        %1253 = vmatprep.subr.mxu0 0.0
        %1254 = vmatpush1.msra.mxu0 0.0
        %1255 = vmatprep.subr.mxu0 0.0
        %1256 = vmatpush1.msra.mxu0 0.0
        %1257 = vmatprep.subr.mxu0 0.0
        %1258 = vmatpush1.msra.mxu0 0.0
        %1259 = vmatprep.subr.mxu0 0.0
        %1260 = vmatpush1.msra.mxu0 0.0
        %1261 = vmatprep.subr.mxu0 0.0
        %1262 = vmatpush1.msra.mxu0 0.0
        %1263 = vmatprep.subr.mxu0 0.0
        %1264 = vmatpush1.msra.mxu0 0.0
        %1265 = vmatprep.subr.mxu0 0.0
        %1266 = vmatpush1.msra.mxu0 0.0
        %1267 = vmatprep.subr.mxu0 0.0
        %1268 = vmatpush1.msra.mxu0 0.0
        %1269 = vmatprep.subr.mxu0 0.0
        %1270 = vmatpush1.msra.mxu0 0.0
        %1271 = vmatprep.subr.mxu0 0.0
        %1272 = vmatpush1.msra.mxu0 0.0
        %1273 = vmatprep.subr.mxu0 0.0
        %1274 = vmatpush1.msra.mxu0 0.0
        %1275 = vmatprep.subr.mxu0 0.0
        %1276 = vmatpush1.msra.mxu0 0.0
        %1277 = vmatprep.subr.mxu0 0.0
        %1278 = vmatpush1.msra.mxu0 0.0
        %1279 = vmatprep.subr.mxu0 0.0
        %1280 = vmatpush1.msra.mxu0 0.0
        %1281 = vmatprep.subr.mxu0 0.0
        %1282 = vmatpush1.msra.mxu0 0.0
        %1283 = vmatprep.subr.mxu0 0.0
        %1284 = vmatpush1.msra.mxu0 0.0
        %1285 = vmatprep.subr.mxu0 0.0
        %1286 = vmatpush1.msra.mxu0 0.0
        %1287 = vmatprep.subr.mxu0 0.0
        %1288 = vmatpush1.msra.mxu0 0.0
        %1289 = vmatprep.subr.mxu0 0.0
        %1290 = vmatpush1.msra.mxu0 0.0
        %1291 = vmatprep.subr.mxu0 0.0
        %1292 = vmatpush1.msra.mxu0 0.0
        %1293 = vmatprep.subr.mxu0 0.0
        %1294 = vmatpush1.msra.mxu0 0.0
        %1295 = vmatprep.subr.mxu0 0.0
        %1296 = vmatpush1.msra.mxu0 0.0
        %1297 = vmatprep.subr.mxu0 0.0
        %1298 = vmatpush1.msra.mxu0 0.0
        %1299 = vmatprep.subr.mxu0 0.0
        %1300 = vmatpush1.msra.mxu0 0.0
        %1301 = vmatprep.mubr.f32.mxu0 0.0
        %1302 = vmatmul.mubr.f32.gmra.mrb[0].mxu0 %v1231
        %v1303 = vpop.f32.mrb[0].mxu0
        %v1304 = vadd.f32 %v1224, %v1303
        %v1305 = vpop.f32.mrb[0].mxu0
        %v1306 = vadd.f32 %v1226, %v1305
        %1307 = vdwg.mxu0
        %v1308 = vadd.f32 %v1304, %v325
        %v1309 = vadd.f32 %v1306, %v329
        %v1310 = vxor.u32 %v1308, 2147483648
        %v1311 = vxor.u32 %v1309, 2147483648
        %v1312 = vmul.f32 %v1310, 1.442695
        %v1313 = vpow.pop %v1312
        %v1314 = vmul.f32 %v1311, 1.442695
        %v1315 = vpow.pop %v1314
        %v1316 = vadd.f32 %v1313, 1.0
        %v1317 = vadd.f32 %v1315, 1.0
        %v1318 = vrcp.pop %v1316
        %v1319 = vmul.f32 1.0, %v1318
        %v1320 = vrcp.pop %v1317
        %v1321 = vmul.f32 1.0, %v1320
        %v1322 = vtanh.pop %v1309
        %v1323 = vmul.f32 %v1319, %v943
        %1325 = vrot.lane.b32.xlu0 %v1322, 64
        %v1326 = vpop.permute.xlu0 %1325
        %v1328 = vmul.f32 %v1319, %v1326
        %1330 = vrot.lane.b32.xlu0 %v1328, 64
        %v1331 = vpop.permute.xlu0 %1330
        %v1333 = vadd.f32 %v1323, %v1331
        %v1334 = vtanh.pop %v1333
        %1336 = vrot.lane.b32.xlu0 %v1334, 64
        %v1337 = vpop.permute.xlu0 %1336
        %v1339 = vmul.f32 %v1321, %v1337
        %v1340 = vld [vmem:[#allocation9] sm:$0xff]
        %v1341 = vld [vmem:[#allocation9 + $0x8] sm:$0xff]
        %v1342 = vld [vmem:[#allocation9 + $0x10] sm:$0xff]
        %v1343 = vld [vmem:[#allocation9 + $0x18] sm:$0xff]
        %v1344 = vld [vmem:[#allocation9 + $0x20] sm:$0xff]
        %v1345 = vld [vmem:[#allocation9 + $0x28] sm:$0xff]
        %v1346 = vld [vmem:[#allocation9 + $0x30] sm:$0xff]
        %v1347 = vld [vmem:[#allocation9 + $0x38] sm:$0xff]
        %v1348 = vld [vmem:[%s5] sm:$0xff]
        %v1349 = vld [vmem:[%s5 + $0x8] sm:$0xff]
        %v1350 = vld [vmem:[%s5 + $0x10] sm:$0xff]
        %v1351 = vld [vmem:[%s5 + $0x18] sm:$0xff]
        %v1352 = vsel %vm566, %v1134, 0
        %1354 = vmatprep.subr.mxu0 0.0
        %1355 = vmatpush1.msra.mxu0 %v1348
        %1356 = vmatprep.subr.mxu0 0.0
        %1357 = vmatpush1.msra.mxu0 %v1349
        %1358 = vmatprep.subr.mxu0 0.0
        %1359 = vmatpush1.msra.mxu0 %v1350
        %1360 = vmatprep.subr.mxu0 0.0
        %1361 = vmatpush1.msra.mxu0 %v1351
        %1362 = vmatprep.subr.mxu0 0.0
        %1363 = vmatpush1.msra.mxu0 0.0
        %1364 = vmatprep.subr.mxu0 0.0
        %1365 = vmatpush1.msra.mxu0 0.0
        %1366 = vmatprep.subr.mxu0 0.0
        %1367 = vmatpush1.msra.mxu0 0.0
        %1368 = vmatprep.subr.mxu0 0.0
        %1369 = vmatpush1.msra.mxu0 0.0
        %1370 = vmatprep.subr.mxu0 0.0
        %1371 = vmatpush1.msra.mxu0 0.0
        %1372 = vmatprep.subr.mxu0 0.0
        %1373 = vmatpush1.msra.mxu0 0.0
        %1374 = vmatprep.subr.mxu0 0.0
        %1375 = vmatpush1.msra.mxu0 0.0
        %1376 = vmatprep.subr.mxu0 0.0
        %1377 = vmatpush1.msra.mxu0 0.0
        %1378 = vmatprep.subr.mxu0 0.0
        %1379 = vmatpush1.msra.mxu0 0.0
        %1380 = vmatprep.subr.mxu0 0.0
        %1381 = vmatpush1.msra.mxu0 0.0
        %1382 = vmatprep.subr.mxu0 0.0
        %1383 = vmatpush1.msra.mxu0 0.0
        %1384 = vmatprep.subr.mxu0 0.0
        %1385 = vmatpush1.msra.mxu0 0.0
        %1386 = vmatprep.subr.mxu0 0.0
        %1387 = vmatpush1.msra.mxu0 0.0
        %1388 = vmatprep.subr.mxu0 0.0
        %1389 = vmatpush1.msra.mxu0 0.0
        %1390 = vmatprep.subr.mxu0 0.0
        %1391 = vmatpush1.msra.mxu0 0.0
        %1392 = vmatprep.subr.mxu0 0.0
        %1393 = vmatpush1.msra.mxu0 0.0
        %1394 = vmatprep.subr.mxu0 0.0
        %1395 = vmatpush1.msra.mxu0 0.0
        %1396 = vmatprep.subr.mxu0 0.0
        %1397 = vmatpush1.msra.mxu0 0.0
        %1398 = vmatprep.subr.mxu0 0.0
        %1399 = vmatpush1.msra.mxu0 0.0
        %1400 = vmatprep.subr.mxu0 0.0
        %1401 = vmatpush1.msra.mxu0 0.0
        %1402 = vmatprep.subr.mxu0 0.0
        %1403 = vmatpush1.msra.mxu0 0.0
        %1404 = vmatprep.subr.mxu0 0.0
        %1405 = vmatpush1.msra.mxu0 0.0
        %1406 = vmatprep.subr.mxu0 0.0
        %1407 = vmatpush1.msra.mxu0 0.0
        %1408 = vmatprep.subr.mxu0 0.0
        %1409 = vmatpush1.msra.mxu0 0.0
        %1410 = vmatprep.subr.mxu0 0.0
        %1411 = vmatpush1.msra.mxu0 0.0
        %1412 = vmatprep.subr.mxu0 0.0
        %1413 = vmatpush1.msra.mxu0 0.0
        %1414 = vmatprep.subr.mxu0 0.0
        %1415 = vmatpush1.msra.mxu0 0.0
        %1416 = vmatprep.subr.mxu0 0.0
        %1417 = vmatpush1.msra.mxu0 0.0
        %1418 = vmatprep.mubr.f32.mxu0 0.0
        %1419 = vmatmul.mubr.f32.gmra.mrb[0].mxu0 %v1352
        %v1420 = vpop.f32.mrb[0].mxu0
        %v1421 = vadd.f32 0.0, %v1420
        %v1422 = vpop.f32.mrb[0].mxu0
        %1423 = vdwg.mxu0
        %v1425 = vsel %vm361, %v1339, 0
        %1427 = vmatprep.subr.mxu0 0.0
        %1428 = vmatpush1.msra.mxu0 %v1340
        %1429 = vmatprep.subr.mxu0 0.0
        %1430 = vmatpush1.msra.mxu0 %v1341
        %1431 = vmatprep.subr.mxu0 0.0
        %1432 = vmatpush1.msra.mxu0 %v1342
        %1433 = vmatprep.subr.mxu0 0.0
        %1434 = vmatpush1.msra.mxu0 %v1343
        %1435 = vmatprep.subr.mxu0 0.0
        %1436 = vmatpush1.msra.mxu0 %v1344
        %1437 = vmatprep.subr.mxu0 0.0
        %1438 = vmatpush1.msra.mxu0 %v1345
        %1439 = vmatprep.subr.mxu0 0.0
        %1440 = vmatpush1.msra.mxu0 %v1346
        %1441 = vmatprep.subr.mxu0 0.0
        %1442 = vmatpush1.msra.mxu0 %v1347
        %1443 = vmatprep.subr.mxu0 0.0
        %1444 = vmatpush1.msra.mxu0 0.0
        %1445 = vmatprep.subr.mxu0 0.0
        %1446 = vmatpush1.msra.mxu0 0.0
        %1447 = vmatprep.subr.mxu0 0.0
        %1448 = vmatpush1.msra.mxu0 0.0
        %1449 = vmatprep.subr.mxu0 0.0
        %1450 = vmatpush1.msra.mxu0 0.0
        %1451 = vmatprep.subr.mxu0 0.0
        %1452 = vmatpush1.msra.mxu0 0.0
        %1453 = vmatprep.subr.mxu0 0.0
        %1454 = vmatpush1.msra.mxu0 0.0
        %1455 = vmatprep.subr.mxu0 0.0
        %1456 = vmatpush1.msra.mxu0 0.0
        %1457 = vmatprep.subr.mxu0 0.0
        %1458 = vmatpush1.msra.mxu0 0.0
        %1459 = vmatprep.subr.mxu0 0.0
        %1460 = vmatpush1.msra.mxu0 0.0
        %1461 = vmatprep.subr.mxu0 0.0
        %1462 = vmatpush1.msra.mxu0 0.0
        %1463 = vmatprep.subr.mxu0 0.0
        %1464 = vmatpush1.msra.mxu0 0.0
        %1465 = vmatprep.subr.mxu0 0.0
        %1466 = vmatpush1.msra.mxu0 0.0
        %1467 = vmatprep.subr.mxu0 0.0
        %1468 = vmatpush1.msra.mxu0 0.0
        %1469 = vmatprep.subr.mxu0 0.0
        %1470 = vmatpush1.msra.mxu0 0.0
        %1471 = vmatprep.subr.mxu0 0.0
        %1472 = vmatpush1.msra.mxu0 0.0
        %1473 = vmatprep.subr.mxu0 0.0
        %1474 = vmatpush1.msra.mxu0 0.0
        %1475 = vmatprep.subr.mxu0 0.0
        %1476 = vmatpush1.msra.mxu0 0.0
        %1477 = vmatprep.subr.mxu0 0.0
        %1478 = vmatpush1.msra.mxu0 0.0
        %1479 = vmatprep.subr.mxu0 0.0
        %1480 = vmatpush1.msra.mxu0 0.0
        %1481 = vmatprep.subr.mxu0 0.0
        %1482 = vmatpush1.msra.mxu0 0.0
        %1483 = vmatprep.subr.mxu0 0.0
        %1484 = vmatpush1.msra.mxu0 0.0
        %1485 = vmatprep.subr.mxu0 0.0
        %1486 = vmatpush1.msra.mxu0 0.0
        %1487 = vmatprep.subr.mxu0 0.0
        %1488 = vmatpush1.msra.mxu0 0.0
        %1489 = vmatprep.subr.mxu0 0.0
        %1490 = vmatpush1.msra.mxu0 0.0
        %1491 = vmatprep.mubr.f32.mxu0 0.0
        %1492 = vmatmul.mubr.f32.gmra.mrb[0].mxu0 %v1425
        %v1493 = vpop.f32.mrb[0].mxu0
        %v1494 = vadd.f32 %v1421, %v1493
        %v1495 = vpop.f32.mrb[0].mxu0
        %1496 = vdwg.mxu0
        %v1497 = vadd.f32 %v1494, %v337
        %v1498 = vxor.u32 %v1497, 2147483648
        %v1499 = vmul.f32 %v1498, 1.442695
        %v1500 = vpow.pop %v1499
        %v1501 = vadd.f32 %v1500, 1.0
        %v1502 = vrcp.pop %v1501
        %v1503 = vmul.f32 1.0, %v1502
        %v1504 = vtanh.pop %v1497
        %v1505 = vmul.f32 %v1503, %v1125
        %1507 = vrot.lane.b32.xlu0 %v1504, 32
        %v1508 = vpop.permute.xlu0 %1507
        %v1510 = vmul.f32 %v1503, %v1508
        %1512 = vrot.lane.b32.xlu0 %v1510, 32
        %v1513 = vpop.permute.xlu0 %1512
        %v1515 = vadd.f32 %v1505, %v1513
        %v1516 = vtanh.pop %v1515
        %1518 = vrot.lane.b32.xlu0 %v1516, 32
        %v1519 = vpop.permute.xlu0 %1518
        %v1521 = vmul.f32 %v1503, %v1519
        %1523 = vrot.lane.b32.xlu0 %v1521, 64
        %v1524 = vpop.permute.xlu0 %1523
        %s1526 = scalar_lea.vmem %s302, 4 [#allocation11]
        %1527 = vst.msk [vmem:[%s1526] sm:$0x3] %vm746, %v1524
        %s1528 = scalar_lea.vmem %s307, 6
        %v1529 = vld [vmem:[%s1528] sm:$0x3]
        %v1530 = vld [vmem:[%s1] sm:$0xff]
        %v1531 = vld [vmem:[#allocation6] sm:$0xff]
        %v1532 = vld [vmem:[#allocation6 + $0x8] sm:$0xff]
        %v1533 = vld [vmem:[#allocation6 + $0x10] sm:$0xff]
        %v1534 = vld [vmem:[#allocation6 + $0x18] sm:$0xff]
        %v1535 = vld [vmem:[#allocation6 + $0x20] sm:$0xff]
        %v1536 = vld [vmem:[#allocation6 + $0x28] sm:$0xff]
        %v1537 = vld [vmem:[#allocation6 + $0x30] sm:$0xff]
        %v1538 = vld [vmem:[#allocation6 + $0x38] sm:$0xff]
        %v1539 = vld [vmem:[#allocation6 + $0x40] sm:$0xff]
        %v1540 = vld [vmem:[#allocation6 + $0x48] sm:$0xff]
        %v1541 = vld [vmem:[#allocation6 + $0x50] sm:$0xff]
        %v1542 = vld [vmem:[#allocation6 + $0x58] sm:$0xff]
        %v1543 = vld [vmem:[#allocation6 + $0x60] sm:$0xff]
        %v1544 = vld [vmem:[#allocation6 + $0x68] sm:$0xff]
        %v1545 = vld [vmem:[#allocation6 + $0x70] sm:$0xff]
        %v1546 = vld [vmem:[#allocation6 + $0x78] sm:$0xff]
        %1547 = vmatprep.subr.mxu0 %v1532
        %1548 = vmatpush1.msra.mxu0 %v1531
        %1549 = vmatprep.subr.mxu0 %v1534
        %1550 = vmatpush1.msra.mxu0 %v1533
        %1551 = vmatprep.subr.mxu0 %v1536
        %1552 = vmatpush1.msra.mxu0 %v1535
        %1553 = vmatprep.subr.mxu0 %v1538
        %1554 = vmatpush1.msra.mxu0 %v1537
        %1555 = vmatprep.subr.mxu0 %v1540
        %1556 = vmatpush1.msra.mxu0 %v1539
        %1557 = vmatprep.subr.mxu0 %v1542
        %1558 = vmatpush1.msra.mxu0 %v1541
        %1559 = vmatprep.subr.mxu0 %v1544
        %1560 = vmatpush1.msra.mxu0 %v1543
        %1561 = vmatprep.subr.mxu0 %v1546
        %1562 = vmatpush1.msra.mxu0 %v1545
        %1563 = vmatprep.subr.mxu0 0.0
        %1564 = vmatpush1.msra.mxu0 0.0
        %1565 = vmatprep.subr.mxu0 0.0
        %1566 = vmatpush1.msra.mxu0 0.0
        %1567 = vmatprep.subr.mxu0 0.0
        %1568 = vmatpush1.msra.mxu0 0.0
        %1569 = vmatprep.subr.mxu0 0.0
        %1570 = vmatpush1.msra.mxu0 0.0
        %1571 = vmatprep.subr.mxu0 0.0
        %1572 = vmatpush1.msra.mxu0 0.0
        %1573 = vmatprep.subr.mxu0 0.0
        %1574 = vmatpush1.msra.mxu0 0.0
        %1575 = vmatprep.subr.mxu0 0.0
        %1576 = vmatpush1.msra.mxu0 0.0
        %1577 = vmatprep.subr.mxu0 0.0
        %1578 = vmatpush1.msra.mxu0 0.0
        %1579 = vmatprep.subr.mxu0 0.0
        %1580 = vmatpush1.msra.mxu0 0.0
        %1581 = vmatprep.subr.mxu0 0.0
        %1582 = vmatpush1.msra.mxu0 0.0
        %1583 = vmatprep.subr.mxu0 0.0
        %1584 = vmatpush1.msra.mxu0 0.0
        %1585 = vmatprep.subr.mxu0 0.0
        %1586 = vmatpush1.msra.mxu0 0.0
        %1587 = vmatprep.subr.mxu0 0.0
        %1588 = vmatpush1.msra.mxu0 0.0
        %1589 = vmatprep.subr.mxu0 0.0
        %1590 = vmatpush1.msra.mxu0 0.0
        %1591 = vmatprep.subr.mxu0 0.0
        %1592 = vmatpush1.msra.mxu0 0.0
        %1593 = vmatprep.subr.mxu0 0.0
        %1594 = vmatpush1.msra.mxu0 0.0
        %1595 = vmatprep.subr.mxu0 0.0
        %1596 = vmatpush1.msra.mxu0 0.0
        %1597 = vmatprep.subr.mxu0 0.0
        %1598 = vmatpush1.msra.mxu0 0.0
        %1599 = vmatprep.subr.mxu0 0.0
        %1600 = vmatpush1.msra.mxu0 0.0
        %1601 = vmatprep.subr.mxu0 0.0
        %1602 = vmatpush1.msra.mxu0 0.0
        %1603 = vmatprep.subr.mxu0 0.0
        %1604 = vmatpush1.msra.mxu0 0.0
        %1605 = vmatprep.subr.mxu0 0.0
        %1606 = vmatpush1.msra.mxu0 0.0
        %1607 = vmatprep.subr.mxu0 0.0
        %1608 = vmatpush1.msra.mxu0 0.0
        %1609 = vmatprep.subr.mxu0 0.0
        %1610 = vmatpush1.msra.mxu0 0.0
        %1611 = vmatprep.mubr.f32.mxu0 0.0
        %1612 = vmatmul.mubr.f32.gmra.mrb[0].mxu0 %v1425
        %v1613 = vpop.f32.mrb[0].mxu0
        %v1614 = vadd.f32 0.0, %v1613
        %v1615 = vpop.f32.mrb[0].mxu0
        %v1616 = vadd.f32 0.0, %v1615
        %1617 = vdwg.mxu0
        %v1619 = vcombine.high %v1530, %v1530
        %v1621 = vsel %vm438, %v1529, 0
        %v1623 = vsel %vm442, %v1530, 0
        %v1625 = vsel %vm442, %v1619, 0
        %1627 = vmatprep.subr.mxu0 %v1625
        %1628 = vmatpush1.msra.mxu0 %v1623
        %1629 = vmatprep.subr.mxu0 0.0
        %1630 = vmatpush1.msra.mxu0 0.0
        %1631 = vmatprep.subr.mxu0 0.0
        %1632 = vmatpush1.msra.mxu0 0.0
        %1633 = vmatprep.subr.mxu0 0.0
        %1634 = vmatpush1.msra.mxu0 0.0
        %1635 = vmatprep.subr.mxu0 0.0
        %1636 = vmatpush1.msra.mxu0 0.0
        %1637 = vmatprep.subr.mxu0 0.0
        %1638 = vmatpush1.msra.mxu0 0.0
        %1639 = vmatprep.subr.mxu0 0.0
        %1640 = vmatpush1.msra.mxu0 0.0
        %1641 = vmatprep.subr.mxu0 0.0
        %1642 = vmatpush1.msra.mxu0 0.0
        %1643 = vmatprep.subr.mxu0 0.0
        %1644 = vmatpush1.msra.mxu0 0.0
        %1645 = vmatprep.subr.mxu0 0.0
        %1646 = vmatpush1.msra.mxu0 0.0
        %1647 = vmatprep.subr.mxu0 0.0
        %1648 = vmatpush1.msra.mxu0 0.0
        %1649 = vmatprep.subr.mxu0 0.0
        %1650 = vmatpush1.msra.mxu0 0.0
        %1651 = vmatprep.subr.mxu0 0.0
        %1652 = vmatpush1.msra.mxu0 0.0
        %1653 = vmatprep.subr.mxu0 0.0
        %1654 = vmatpush1.msra.mxu0 0.0
        %1655 = vmatprep.subr.mxu0 0.0
        %1656 = vmatpush1.msra.mxu0 0.0
        %1657 = vmatprep.subr.mxu0 0.0
        %1658 = vmatpush1.msra.mxu0 0.0
        %1659 = vmatprep.subr.mxu0 0.0
        %1660 = vmatpush1.msra.mxu0 0.0
        %1661 = vmatprep.subr.mxu0 0.0
        %1662 = vmatpush1.msra.mxu0 0.0
        %1663 = vmatprep.subr.mxu0 0.0
        %1664 = vmatpush1.msra.mxu0 0.0
        %1665 = vmatprep.subr.mxu0 0.0
        %1666 = vmatpush1.msra.mxu0 0.0
        %1667 = vmatprep.subr.mxu0 0.0
        %1668 = vmatpush1.msra.mxu0 0.0
        %1669 = vmatprep.subr.mxu0 0.0
        %1670 = vmatpush1.msra.mxu0 0.0
        %1671 = vmatprep.subr.mxu0 0.0
        %1672 = vmatpush1.msra.mxu0 0.0
        %1673 = vmatprep.subr.mxu0 0.0
        %1674 = vmatpush1.msra.mxu0 0.0
        %1675 = vmatprep.subr.mxu0 0.0
        %1676 = vmatpush1.msra.mxu0 0.0
        %1677 = vmatprep.subr.mxu0 0.0
        %1678 = vmatpush1.msra.mxu0 0.0
        %1679 = vmatprep.subr.mxu0 0.0
        %1680 = vmatpush1.msra.mxu0 0.0
        %1681 = vmatprep.subr.mxu0 0.0
        %1682 = vmatpush1.msra.mxu0 0.0
        %1683 = vmatprep.subr.mxu0 0.0
        %1684 = vmatpush1.msra.mxu0 0.0
        %1685 = vmatprep.subr.mxu0 0.0
        %1686 = vmatpush1.msra.mxu0 0.0
        %1687 = vmatprep.subr.mxu0 0.0
        %1688 = vmatpush1.msra.mxu0 0.0
        %1689 = vmatprep.subr.mxu0 0.0
        %1690 = vmatpush1.msra.mxu0 0.0
        %1691 = vmatprep.mubr.f32.mxu0 0.0
        %1692 = vmatmul.mubr.f32.gmra.mrb[0].mxu0 %v1621
        %v1693 = vpop.f32.mrb[0].mxu0
        %v1694 = vadd.f32 %v1614, %v1693
        %v1695 = vpop.f32.mrb[0].mxu0
        %v1696 = vadd.f32 %v1616, %v1695
        %1697 = vdwg.mxu0
        %v1698 = vadd.f32 %v1694, %v325
        %v1699 = vadd.f32 %v1696, %v329
        %v1700 = vxor.u32 %v1698, 2147483648
        %v1701 = vxor.u32 %v1699, 2147483648
        %v1702 = vmul.f32 %v1700, 1.442695
        %v1703 = vpow.pop %v1702
        %v1704 = vmul.f32 %v1701, 1.442695
        %v1705 = vpow.pop %v1704
        %v1706 = vadd.f32 %v1703, 1.0
        %v1707 = vadd.f32 %v1705, 1.0
        %v1708 = vrcp.pop %v1706
        %v1709 = vmul.f32 1.0, %v1708
        %v1710 = vrcp.pop %v1707
        %v1711 = vmul.f32 1.0, %v1710
        %v1712 = vtanh.pop %v1699
        %v1713 = vmul.f32 %v1709, %v1333
        %1715 = vrot.lane.b32.xlu0 %v1712, 64
        %v1716 = vpop.permute.xlu0 %1715
        %v1718 = vmul.f32 %v1709, %v1716
        %1720 = vrot.lane.b32.xlu0 %v1718, 64
        %v1721 = vpop.permute.xlu0 %1720
        %v1723 = vadd.f32 %v1713, %v1721
        %v1724 = vtanh.pop %v1723
        %1726 = vrot.lane.b32.xlu0 %v1724, 64
        %v1727 = vpop.permute.xlu0 %1726
        %v1729 = vmul.f32 %v1711, %v1727
        %v1730 = vld [vmem:[#allocation9] sm:$0xff]
        %v1731 = vld [vmem:[#allocation9 + $0x8] sm:$0xff]
        %v1732 = vld [vmem:[#allocation9 + $0x10] sm:$0xff]
        %v1733 = vld [vmem:[#allocation9 + $0x18] sm:$0xff]
        %v1734 = vld [vmem:[#allocation9 + $0x20] sm:$0xff]
        %v1735 = vld [vmem:[#allocation9 + $0x28] sm:$0xff]
        %v1736 = vld [vmem:[#allocation9 + $0x30] sm:$0xff]
        %v1737 = vld [vmem:[#allocation9 + $0x38] sm:$0xff]
        %v1738 = vld [vmem:[%s5] sm:$0xff]
        %v1739 = vld [vmem:[%s5 + $0x8] sm:$0xff]
        %v1740 = vld [vmem:[%s5 + $0x10] sm:$0xff]
        %v1741 = vld [vmem:[%s5 + $0x18] sm:$0xff]
        %v1742 = vsel %vm566, %v1524, 0
        %1744 = vmatprep.subr.mxu0 0.0
        %1745 = vmatpush1.msra.mxu0 %v1738
        %1746 = vmatprep.subr.mxu0 0.0
        %1747 = vmatpush1.msra.mxu0 %v1739
        %1748 = vmatprep.subr.mxu0 0.0
        %1749 = vmatpush1.msra.mxu0 %v1740
        %1750 = vmatprep.subr.mxu0 0.0
        %1751 = vmatpush1.msra.mxu0 %v1741
        %1752 = vmatprep.subr.mxu0 0.0
        %1753 = vmatpush1.msra.mxu0 0.0
        %1754 = vmatprep.subr.mxu0 0.0
        %1755 = vmatpush1.msra.mxu0 0.0
        %1756 = vmatprep.subr.mxu0 0.0
        %1757 = vmatpush1.msra.mxu0 0.0
        %1758 = vmatprep.subr.mxu0 0.0
        %1759 = vmatpush1.msra.mxu0 0.0
        %1760 = vmatprep.subr.mxu0 0.0
        %1761 = vmatpush1.msra.mxu0 0.0
        %1762 = vmatprep.subr.mxu0 0.0
        %1763 = vmatpush1.msra.mxu0 0.0
        %1764 = vmatprep.subr.mxu0 0.0
        %1765 = vmatpush1.msra.mxu0 0.0
        %1766 = vmatprep.subr.mxu0 0.0
        %1767 = vmatpush1.msra.mxu0 0.0
        %1768 = vmatprep.subr.mxu0 0.0
        %1769 = vmatpush1.msra.mxu0 0.0
        %1770 = vmatprep.subr.mxu0 0.0
        %1771 = vmatpush1.msra.mxu0 0.0
        %1772 = vmatprep.subr.mxu0 0.0
        %1773 = vmatpush1.msra.mxu0 0.0
        %1774 = vmatprep.subr.mxu0 0.0
        %1775 = vmatpush1.msra.mxu0 0.0
        %1776 = vmatprep.subr.mxu0 0.0
        %1777 = vmatpush1.msra.mxu0 0.0
        %1778 = vmatprep.subr.mxu0 0.0
        %1779 = vmatpush1.msra.mxu0 0.0
        %1780 = vmatprep.subr.mxu0 0.0
        %1781 = vmatpush1.msra.mxu0 0.0
        %1782 = vmatprep.subr.mxu0 0.0
        %1783 = vmatpush1.msra.mxu0 0.0
        %1784 = vmatprep.subr.mxu0 0.0
        %1785 = vmatpush1.msra.mxu0 0.0
        %1786 = vmatprep.subr.mxu0 0.0
        %1787 = vmatpush1.msra.mxu0 0.0
        %1788 = vmatprep.subr.mxu0 0.0
        %1789 = vmatpush1.msra.mxu0 0.0
        %1790 = vmatprep.subr.mxu0 0.0
        %1791 = vmatpush1.msra.mxu0 0.0
        %1792 = vmatprep.subr.mxu0 0.0
        %1793 = vmatpush1.msra.mxu0 0.0
        %1794 = vmatprep.subr.mxu0 0.0
        %1795 = vmatpush1.msra.mxu0 0.0
        %1796 = vmatprep.subr.mxu0 0.0
        %1797 = vmatpush1.msra.mxu0 0.0
        %1798 = vmatprep.subr.mxu0 0.0
        %1799 = vmatpush1.msra.mxu0 0.0
        %1800 = vmatprep.subr.mxu0 0.0
        %1801 = vmatpush1.msra.mxu0 0.0
        %1802 = vmatprep.subr.mxu0 0.0
        %1803 = vmatpush1.msra.mxu0 0.0
        %1804 = vmatprep.subr.mxu0 0.0
        %1805 = vmatpush1.msra.mxu0 0.0
        %1806 = vmatprep.subr.mxu0 0.0
        %1807 = vmatpush1.msra.mxu0 0.0
        %1808 = vmatprep.mubr.f32.mxu0 0.0
        %1809 = vmatmul.mubr.f32.gmra.mrb[0].mxu0 %v1742
        %v1810 = vpop.f32.mrb[0].mxu0
        %v1811 = vadd.f32 0.0, %v1810
        %v1812 = vpop.f32.mrb[0].mxu0
        %1813 = vdwg.mxu0
        %v1815 = vsel %vm361, %v1729, 0
        %1817 = vmatprep.subr.mxu0 0.0
        %1818 = vmatpush1.msra.mxu0 %v1730
        %1819 = vmatprep.subr.mxu0 0.0
        %1820 = vmatpush1.msra.mxu0 %v1731
        %1821 = vmatprep.subr.mxu0 0.0
        %1822 = vmatpush1.msra.mxu0 %v1732
        %1823 = vmatprep.subr.mxu0 0.0
        %1824 = vmatpush1.msra.mxu0 %v1733
        %1825 = vmatprep.subr.mxu0 0.0
        %1826 = vmatpush1.msra.mxu0 %v1734
        %1827 = vmatprep.subr.mxu0 0.0
        %1828 = vmatpush1.msra.mxu0 %v1735
        %1829 = vmatprep.subr.mxu0 0.0
        %1830 = vmatpush1.msra.mxu0 %v1736
        %1831 = vmatprep.subr.mxu0 0.0
        %1832 = vmatpush1.msra.mxu0 %v1737
        %1833 = vmatprep.subr.mxu0 0.0
        %1834 = vmatpush1.msra.mxu0 0.0
        %1835 = vmatprep.subr.mxu0 0.0
        %1836 = vmatpush1.msra.mxu0 0.0
        %1837 = vmatprep.subr.mxu0 0.0
        %1838 = vmatpush1.msra.mxu0 0.0
        %1839 = vmatprep.subr.mxu0 0.0
        %1840 = vmatpush1.msra.mxu0 0.0
        %1841 = vmatprep.subr.mxu0 0.0
        %1842 = vmatpush1.msra.mxu0 0.0
        %1843 = vmatprep.subr.mxu0 0.0
        %1844 = vmatpush1.msra.mxu0 0.0
        %1845 = vmatprep.subr.mxu0 0.0
        %1846 = vmatpush1.msra.mxu0 0.0
        %1847 = vmatprep.subr.mxu0 0.0
        %1848 = vmatpush1.msra.mxu0 0.0
        %1849 = vmatprep.subr.mxu0 0.0
        %1850 = vmatpush1.msra.mxu0 0.0
        %1851 = vmatprep.subr.mxu0 0.0
        %1852 = vmatpush1.msra.mxu0 0.0
        %1853 = vmatprep.subr.mxu0 0.0
        %1854 = vmatpush1.msra.mxu0 0.0
        %1855 = vmatprep.subr.mxu0 0.0
        %1856 = vmatpush1.msra.mxu0 0.0
        %1857 = vmatprep.subr.mxu0 0.0
        %1858 = vmatpush1.msra.mxu0 0.0
        %1859 = vmatprep.subr.mxu0 0.0
        %1860 = vmatpush1.msra.mxu0 0.0
        %1861 = vmatprep.subr.mxu0 0.0
        %1862 = vmatpush1.msra.mxu0 0.0
        %1863 = vmatprep.subr.mxu0 0.0
        %1864 = vmatpush1.msra.mxu0 0.0
        %1865 = vmatprep.subr.mxu0 0.0
        %1866 = vmatpush1.msra.mxu0 0.0
        %1867 = vmatprep.subr.mxu0 0.0
        %1868 = vmatpush1.msra.mxu0 0.0
        %1869 = vmatprep.subr.mxu0 0.0
        %1870 = vmatpush1.msra.mxu0 0.0
        %1871 = vmatprep.subr.mxu0 0.0
        %1872 = vmatpush1.msra.mxu0 0.0
        %1873 = vmatprep.subr.mxu0 0.0
        %1874 = vmatpush1.msra.mxu0 0.0
        %1875 = vmatprep.subr.mxu0 0.0
        %1876 = vmatpush1.msra.mxu0 0.0
        %1877 = vmatprep.subr.mxu0 0.0
        %1878 = vmatpush1.msra.mxu0 0.0
        %1879 = vmatprep.subr.mxu0 0.0
        %1880 = vmatpush1.msra.mxu0 0.0
        %1881 = vmatprep.mubr.f32.mxu0 0.0
        %1882 = vmatmul.mubr.f32.gmra.mrb[0].mxu0 %v1815
        %v1883 = vpop.f32.mrb[0].mxu0
        %v1884 = vadd.f32 %v1811, %v1883
        %v1885 = vpop.f32.mrb[0].mxu0
        %1886 = vdwg.mxu0
        %v1887 = vadd.f32 %v1884, %v337
        %v1888 = vxor.u32 %v1887, 2147483648
        %v1889 = vmul.f32 %v1888, 1.442695
        %v1890 = vpow.pop %v1889
        %v1891 = vadd.f32 %v1890, 1.0
        %v1892 = vrcp.pop %v1891
        %v1893 = vmul.f32 1.0, %v1892
        %v1894 = vtanh.pop %v1887
        %v1895 = vmul.f32 %v1893, %v1515
        %1897 = vrot.lane.b32.xlu0 %v1894, 32
        %v1898 = vpop.permute.xlu0 %1897
        %v1900 = vmul.f32 %v1893, %v1898
        %1902 = vrot.lane.b32.xlu0 %v1900, 32
        %v1903 = vpop.permute.xlu0 %1902
        %v1905 = vadd.f32 %v1895, %v1903
        %v1906 = vtanh.pop %v1905
        %1908 = vrot.lane.b32.xlu0 %v1906, 32
        %v1909 = vpop.permute.xlu0 %1908
        %v1911 = vmul.f32 %v1893, %v1909
        %1913 = vrot.lane.b32.xlu0 %v1911, 64
        %v1914 = vpop.permute.xlu0 %1913
        %s1916 = scalar_lea.vmem %s302, 6 [#allocation11]
        %1917 = vst.msk [vmem:[%s1916] sm:$0x3] %vm746, %v1914
        %vm1918 = vcmask 517120
        %1919 = vst.msk [vmem:[#allocation2] sm:$0x3] %vm1918, %v1729
        %1921 = vrot.lane.b32.xlu0 %v1723, 64
        %v1922 = vpop.permute.xlu0 %1921
        %1924 = vst.msk [vmem:[#allocation3] sm:$0x3] %vm1918, %v1922
        %1925 = vst.msk [vmem:[#allocation4] sm:$0x3] %vm746, %v1914
        %1927 = vrot.lane.b32.xlu0 %v1905, 96
        %v1928 = vpop.permute.xlu0 %1927
        %1930 = vst.msk [vmem:[#allocation5] sm:$0x3] %vm746, %v1928
        %s1931 = sand.u32 %s183, 1
        %s1932 = scalar_lea.sflag [#allocation8], %s1931
        %s1933 = sand.u32 %s183, 1
        %s1934 = smul.addr %s1933, 8
        %s1935 = scalar_lea.vmem [#allocation11], %s1934
        // Predicated region
        $region61: #{tpu_custom_call.1} parent=47 // pred_check
          %p1936 = pneg %p193
        $region62: #{tpu_custom_call.1} parent=47 // pred_check_branch
          %1938 = sbr.rel (%p1936) target = $region64
        $region63: #{tpu_custom_call.1} parent=47 // pred_region
          %s1939 = smul.u32 4, %s23
          %s1941 = ssub.s32 128, 128
          %1942 = vsyncadd %s1932, %s1941
          %s1943 = smul.addr %s1939, 32
          %s1944 = scalar_lea.hbm %s7, %s1943
          %s1945 = sshll.u32 %s1935, 4
          %s1946 = int_to_ptr.vmem [resolvable:$true] %s1945
          %1951 = dma.vmem_to_hbm [thread:$0]  %s1946, 128, %s1944, %s1932, 32, 32, 2
        $region64: #{tpu_custom_call.1} parent=47 // pred_fallthru
          _
      $region48: #{tpu_custom_call.1} parent=5 // pred_fallthru
        _
      %p1952 = scmp.le.s32.totalorder 2, %s18
      // Predicated region
      $region65: #{tpu_custom_call.1} parent=5 // pred_check
        %p1953 = pneg %p1952
      $region66: #{tpu_custom_call.1} parent=5 // pred_check_branch
        %1955 = sbr.rel (%p1953) target = $region68
      $region67: #{tpu_custom_call.1} parent=5 // pred_region
        %s1956 = ssub.s32 %s18, 2
        // Predicated region
        $region69: #{tpu_custom_call.1} parent=67 // pred_check
          %p1957 = pneg %p199
        $region70: #{tpu_custom_call.1} parent=67 // pred_check_branch
          %1959 = sbr.rel (%p1957) target = $region72
        $region71: #{tpu_custom_call.1} parent=67 // pred_region
          %s1960 = sand.u32 %s184, 1
          %s1961 = scalar_lea.sflag [#allocation8], %s1960
          %s1962 = sand.u32 %s184, 1
          %s1963 = smul.addr %s1962, 8
          %s1964 = scalar_lea.vmem [#allocation11], %s1963
          %1965 = dma.done %s1961, 128
        $region72: #{tpu_custom_call.1} parent=67 // pred_fallthru
          _
      $region68: #{tpu_custom_call.1} parent=5 // pred_fallthru
        _
    $region6: #{tpu_custom_call.1} parent=1 // loop_footer
      %s22 = sadd.s32 1, %s18
    $region7: #{tpu_custom_call.1} parent=1 // loop_footer_branch
      %17 = sbr.rel target = $region3
    $region8: #{tpu_custom_call.1} parent=1 // loop_exit
      _
    %1966 = vsyncpa [#allocation7], 1
    %s1967 = scalar_lea.sflag [#allocation7], 1
    %1968 = vsyncpa %s1967, 1
    %1969 = vsyncpa [#allocation10], 1
    %1970 = vsyncpa [#allocation8], 1
    %s1971 = scalar_lea.sflag [#allocation8], 1
    %1972 = vsyncpa %s1971, 1

</llo_original>
